<compile_context>
chip_gen: v5e
topology: v5e:2x2
jax: 0.10.0
libtpu: 0.0.40
codegen_flags: <defaults>
</compile_context>

<pallas_src>
import functools

import jax
import jax.numpy as jnp
from jax.experimental import pallas as pl
from jax.experimental.pallas import tpu as pltpu


# --------------------------------------------------------------------------
# Fused kernel: MaxPool2d(2) -> (conv3x3 + BN-shift + ReLU) x 2, one image/step
# --------------------------------------------------------------------------
def fused_down_sample_kernel(x_ref, w1_ref, sh1_ref, w2_ref, sh2_ref, o_ref,
                             pad1_ref, pad2_ref):
    # x_ref:    (1, Hp, 2, Wp, 2, Cin)  -- NHWC input block, 2x2 pool taps split out
    # w1_ref:   (9, Cin,  Cout) bf16    -- BN1 scale folded in, tap-major (ky*3+kx)
    # sh1_ref:  (1, Cout) f32           -- BN1 shift (incl. conv bias)
    # w2_ref:   (9, Cout, Cout) bf16
    # sh2_ref:  (1, Cout) f32
    # o_ref:    (1, Hp, Wp, Cout)       -- NHWC output (channel-last = lane axis)
    # pad*_ref: (1, Hp+2, Wp+2, C) f32  -- VMEM scratch for zero-padded conv inputs
    _, Hp, _, Wp, _, Cin = x_ref.shape
    Cout = o_ref.shape[-1]

    # ---- MaxPool2d(2): elementwise max over the 4 pool taps (pure VPU) ----
    x = x_ref[...]
    pooled = jnp.maximum(
        jnp.maximum(x[:, :, 0:1, :, 0:1, :], x[:, :, 0:1, :, 1:2, :]),
        jnp.maximum(x[:, :, 1:2, :, 0:1, :], x[:, :, 1:2, :, 1:2, :]),
    ).reshape(1, Hp, Wp, Cin)                                       # (1,Hp,Wp,Cin)

    def conv3x3_bn_relu(inp, pad_ref, w_ref, sh_ref):
        n, hp, wp, cin = inp.shape
        cout = w_ref.shape[-1]
        zdt = pad_ref.dtype

        # Halo-only zeroing: O(perimeter) stores instead of zeroing the whole
        # buffer (the interior is fully overwritten every call).
        pad_ref[:, 0:1, :, :] = jnp.zeros((n, 1, wp + 2, cin), zdt)
        pad_ref[:, hp + 1:hp + 2, :, :] = jnp.zeros((n, 1, wp + 2, cin), zdt)
        pad_ref[:, :, 0:1, :] = jnp.zeros((n, hp + 2, 1, cin), zdt)
        pad_ref[:, :, wp + 1:wp + 2, :] = jnp.zeros((n, hp + 2, 1, cin), zdt)
        pad_ref[:, 1:hp + 1, 1:wp + 1, :] = inp
        xp = pad_ref[...]                                           # (n,hp+2,wp+2,cin)

        # 9 accumulating per-tap matmuls: bf16 operands, f32 accumulator (MXU).
        acc = jnp.zeros((n * hp * wp, cout), jnp.float32)
        for ky in range(3):
            for kx in range(3):
                tap = xp[:, ky:ky + hp, kx:kx + wp, :].reshape(n * hp * wp, cin)
                acc = acc + jnp.dot(tap.astype(jnp.bfloat16),
                                    w_ref[ky * 3 + kx],
                                    preferred_element_type=jnp.float32)
        y = jnp.maximum(acc + sh_ref[...], 0.0)                     # BN shift + ReLU
        return y.reshape(n, hp, wp, cout)

    y1 = conv3x3_bn_relu(pooled, pad1_ref, w1_ref, sh1_ref)         # (1,Hp,Wp,Cout)
    y2 = conv3x3_bn_relu(y1, pad2_ref, w2_ref, sh2_ref)             # (1,Hp,Wp,Cout)
    o_ref[...] = y2.astype(o_ref.dtype)


# --------------------------------------------------------------------------
# Wrapper: BN folding + layout plumbing
# --------------------------------------------------------------------------
def fold_bn(bias, gamma, beta, mean, var, eps=1e-5):
    s = gamma / jnp.sqrt(var + eps)
    return s, (bias - mean) * s + beta


def _tile_bytes(shape, itemsize):
    """Rough VMEM footprint of one buffer, last two dims padded to (8, 128)."""
    s = list(shape)
    if len(s) >= 2:
        s[-2] = -(-s[-2] // 8) * 8
        s[-1] = -(-s[-1] // 128) * 128
    elif len(s) == 1:
        s[-1] = -(-s[-1] // 128) * 128
    n = 1
    for d in s:
        n *= d
    return n * itemsize


def down_sample_forward_nhwc(x_nhwc, params):
    """MaxPool2d(2) -> conv3x3(BN,ReLU) -> conv3x3(BN,ReLU). NHWC in / NHWC out."""
    N, H, W, Cin = x_nhwc.shape
    assert H % 2 == 0 and W % 2 == 0, "MaxPool2d(2) path requires even H and W"
    Hp, Wp = H // 2, W // 2
    Cout = params["w1_hwio"].shape[-1]

    # Fold BN (inference) into per-output-channel scale/shift; fold the scale
    # into the bf16 conv weights (one-time parameter transform).
    s1, sh1 = fold_bn(params["b1"], params["g1"], params["be1"],
                      params["m1"], params["v1"])
    s2, sh2 = fold_bn(params["b2"], params["g2"], params["be2"],
                      params["m2"], params["v2"])
    w1 = (params["w1_hwio"] * s1).reshape(9, Cin, Cout).astype(jnp.bfloat16)
    w2 = (params["w2_hwio"] * s2).reshape(9, Cout, Cout).astype(jnp.bfloat16)

    # Free metadata reshape: expose the 2x2 pool taps as their own axes.
    xr = x_nhwc.reshape(N, Hp, 2, Wp, 2, Cin)

    # VMEM budget: double-buffered I/O blocks + resident weights + padded
    # scratches + matmul working set, with 2x headroom (16 MiB floor).
    vmem = 0
    vmem += 2 * _tile_bytes((1, Hp, 2, Wp, 2, Cin), 4)          # input double buffer
    vmem += 2 * _tile_bytes((1, Hp, Wp, Cout), 4)               # output double buffer
    vmem += 2 * (_tile_bytes((9, Cin, Cout), 2) + _tile_bytes((9, Cout, Cout), 2))
    vmem += 4 * _tile_bytes((1, Cout), 4)
    vmem += _tile_bytes((1, Hp + 2, Wp + 2, Cin), 4)            # pad scratch 1
    vmem += _tile_bytes((1, Hp + 2, Wp + 2, Cout), 4)           # pad scratch 2
    vmem += 6 * _tile_bytes((Hp * Wp, max(Cin, Cout)), 4)       # acc + live operands
    vmem_limit = int(max(16 * 1024 * 1024, 2 * vmem))

    out = pl.pallas_call(
        fused_down_sample_kernel,
        out_shape=jax.ShapeDtypeStruct((N, Hp, Wp, Cout), jnp.float32),
        grid=(N,),
        in_specs=[
            pl.BlockSpec((1, Hp, 2, Wp, 2, Cin), lambda i: (i, 0, 0, 0, 0, 0)),
            pl.BlockSpec((9, Cin, Cout), lambda i: (0, 0, 0)),
            pl.BlockSpec((1, Cout), lambda i: (0, 0)),
            pl.BlockSpec((9, Cout, Cout), lambda i: (0, 0, 0)),
            pl.BlockSpec((1, Cout), lambda i: (0, 0)),
        ],
        out_specs=pl.BlockSpec((1, Hp, Wp, Cout), lambda i: (i, 0, 0, 0)),
        scratch_shapes=[
            pltpu.VMEM((1, Hp + 2, Wp + 2, Cin), jnp.float32),
            pltpu.VMEM((1, Hp + 2, Wp + 2, Cout), jnp.float32),
        ],
        compiler_params=pltpu.CompilerParams(
            dimension_semantics=("parallel",),
            vmem_limit_bytes=vmem_limit),
    )(xr, w1, sh1.reshape(1, Cout), w2, sh2.reshape(1, Cout))
    return out


def down_sample_forward(x_nchw, params):
    """NCHW adapter matching the PyTorch module interface."""
    # One layout pass to channel-last (conv-as-matmul wants C on the lane axis).
    # A real NHWC pipeline would call down_sample_forward_nhwc directly and skip it.
    x_nhwc = jnp.transpose(x_nchw, (0, 2, 3, 1))
    out = down_sample_forward_nhwc(x_nhwc, params)
    return jnp.transpose(out, (0, 3, 1, 2))


# --------------------------------------------------------------------------
# Pure-JAX reference (f32) for correctness check
# --------------------------------------------------------------------------
def ref_forward(x_nchw, params):
    x = jax.lax.reduce_window(x_nchw, -jnp.inf, jax.lax.max,
                              (1, 1, 2, 2), (1, 1, 2, 2), "VALID")

    def block(x, w_oihw, b, g, be, m, v):
        y = jax.lax.conv_general_dilated(
            x, w_oihw, (1, 1), ((1, 1), (1, 1)),
            dimension_numbers=("NCHW", "OIHW", "NCHW"))
        y = y + b[None, :, None, None]
        y = (g[None, :, None, None] * (y - m[None, :, None, None])
             / jnp.sqrt(v[None, :, None, None] + 1e-5) + be[None, :, None, None])
        return jnp.maximum(y, 0.0)

    x = block(x, params["w1_oihw"], params["b1"], params["g1"], params["be1"],
              params["m1"], params["v1"])
    x = block(x, params["w2_oihw"], params["b2"], params["g2"], params["be2"],
              params["m2"], params["v2"])
    return x


# --------------------------------------------------------------------------
# Main
# --------------------------------------------------------------------------
def make_params(key, cin, cout):
    ks = jax.random.split(key, 10)
    fan1 = cin * 9
    fan2 = cout * 9
    w1 = jax.random.normal(ks[0], (cout, cin, 3, 3), jnp.float32) / jnp.sqrt(fan1)
    w2 = jax.random.normal(ks[1], (cout, cout, 3, 3), jnp.float32) / jnp.sqrt(fan2)
    return {
        "w1_oihw": w1, "w2_oihw": w2,
        "w1_hwio": jnp.transpose(w1, (2, 3, 1, 0)),  # (3,3,Cin,Cout)
        "w2_hwio": jnp.transpose(w2, (2, 3, 1, 0)),
        "b1": 0.1 * jax.random.normal(ks[2], (cout,), jnp.float32),
        "b2": 0.1 * jax.random.normal(ks[3], (cout,), jnp.float32),
        "g1": 1.0 + 0.1 * jax.random.normal(ks[4], (cout,), jnp.float32),
        "g2": 1.0 + 0.1 * jax.random.normal(ks[5], (cout,), jnp.float32),
        "be1": 0.1 * jax.random.normal(ks[6], (cout,), jnp.float32),
        "be2": 0.1 * jax.random.normal(ks[7], (cout,), jnp.float32),
        "m1": 0.1 * jax.random.normal(ks[8], (cout,), jnp.float32),
        "m2": 0.1 * jax.random.normal(ks[9], (cout,), jnp.float32),
        "v1": jnp.linspace(0.5, 1.5, cout, dtype=jnp.float32),
        "v2": jnp.linspace(0.8, 1.2, cout, dtype=jnp.float32),
    }


if __name__ == "__main__":
    key = jax.random.PRNGKey(0)
    kx, kp = jax.random.split(key)

    N, Cin, Cout, H, W = 2, 4, 8, 16, 16
    x = jax.random.normal(kx, (N, Cin, H, W), jnp.float32)
    params = make_params(kp, Cin, Cout)

    fwd = jax.jit(functools.partial(down_sample_forward, params=params))
    out = jax.block_until_ready(fwd(x))

    ref = jax.block_until_ready(ref_forward(x, params))
    assert out.shape == (N, Cout, H // 2, W // 2), out.shape
    # bf16 MXU matmuls give ~1e-2 relative error vs. the f32 XLA reference.
    assert jnp.allclose(out, ref, atol=1e-1, rtol=1e-1), \
        float(jnp.max(jnp.abs(out - ref)))

    print("KERNEL_OK")
</pallas_src>

<mosaic_0001>
module attributes {stable_mosaic.version = 11 : i64} {
  func.func @fused_down_sample_kernel(%arg0: i32, %arg1: memref<1x8x2x8x2x4xf32, #tpu.memory_space<vmem>>, %arg2: memref<9x4x8xbf16, #tpu.memory_space<vmem>>, %arg3: memref<1x8xf32, #tpu.memory_space<vmem>>, %arg4: memref<9x8x8xbf16, #tpu.memory_space<vmem>>, %arg5: memref<1x8xf32, #tpu.memory_space<vmem>>, %arg6: memref<1x8x8x8xf32, #tpu.memory_space<vmem>>, %arg7: memref<1x10x10x4xf32, #tpu.memory_space<vmem>>, %arg8: memref<1x10x10x8xf32, #tpu.memory_space<vmem>>) attributes {dimension_semantics = [#tpu.dimension_semantics<parallel>], iteration_bounds = array<i64: 2>, scalar_prefetch = 0 : i64, scratch_operands = 2 : i64, tpu.core_type = #tpu.core_type<tc>, window_params = [{transform_indices = @transform_0, window_bounds = array<i64: 1, 8, 2, 8, 2, 4>}, {pipeline_mode = #tpu.pipeline_mode<synchronous>, transform_indices = @transform_1, window_bounds = array<i64: 9, 4, 8>}, {pipeline_mode = #tpu.pipeline_mode<synchronous>, transform_indices = @transform_2, window_bounds = array<i64: 1, 8>}, {pipeline_mode = #tpu.pipeline_mode<synchronous>, transform_indices = @transform_3, window_bounds = array<i64: 9, 8, 8>}, {pipeline_mode = #tpu.pipeline_mode<synchronous>, transform_indices = @transform_4, window_bounds = array<i64: 1, 8>}, {transform_indices = @transform_5, window_bounds = array<i64: 1, 8, 8, 8>}]} {
    %c0 = arith.constant 0 : index
    %c0_0 = arith.constant 0 : index
    %c0_1 = arith.constant 0 : index
    %c0_2 = arith.constant 0 : index
    %c0_3 = arith.constant 0 : index
    %c0_4 = arith.constant 0 : index
    %0 = vector.load %arg1[%c0, %c0_0, %c0_1, %c0_2, %c0_3, %c0_4] : memref<1x8x2x8x2x4xf32, #tpu.memory_space<vmem>>, vector<1x8x2x8x2x4xf32>
    %1 = vector.extract_strided_slice %0 {offsets = [0, 0, 0, 0, 0, 0], sizes = [1, 8, 1, 8, 1, 4], strides = [1, 1, 1, 1, 1, 1]} : vector<1x8x2x8x2x4xf32> to vector<1x8x1x8x1x4xf32>
    %2 = vector.extract_strided_slice %0 {offsets = [0, 0, 0, 0, 1, 0], sizes = [1, 8, 1, 8, 1, 4], strides = [1, 1, 1, 1, 1, 1]} : vector<1x8x2x8x2x4xf32> to vector<1x8x1x8x1x4xf32>
    %3 = arith.maximumf %1, %2 : vector<1x8x1x8x1x4xf32>
    %4 = vector.extract_strided_slice %0 {offsets = [0, 0, 1, 0, 0, 0], sizes = [1, 8, 1, 8, 1, 4], strides = [1, 1, 1, 1, 1, 1]} : vector<1x8x2x8x2x4xf32> to vector<1x8x1x8x1x4xf32>
    %5 = vector.extract_strided_slice %0 {offsets = [0, 0, 1, 0, 1, 0], sizes = [1, 8, 1, 8, 1, 4], strides = [1, 1, 1, 1, 1, 1]} : vector<1x8x2x8x2x4xf32> to vector<1x8x1x8x1x4xf32>
    %6 = arith.maximumf %4, %5 : vector<1x8x1x8x1x4xf32>
    %7 = arith.maximumf %3, %6 : vector<1x8x1x8x1x4xf32>
    %8 = vector.shape_cast %7 : vector<1x8x1x8x1x4xf32> to vector<1x8x8x4xf32>
    %cst = arith.constant 0.000000e+00 : f32
    %9 = vector.broadcast %cst : f32 to vector<1x1x10x4xf32>
    %c0_5 = arith.constant 0 : index
    %c0_6 = arith.constant 0 : index
    %c0_7 = arith.constant 0 : index
    %c0_8 = arith.constant 0 : index
    %10 = vector.load %arg7[%c0_5, %c0_6, %c0_7, %c0_8] : memref<1x10x10x4xf32, #tpu.memory_space<vmem>>, vector<1x1x10x4xf32>
    tpu.vector_store %arg7[%c0_5, %c0_6, %c0_7, %c0_8], %9 {strides = array<i32>} : memref<1x10x10x4xf32, #tpu.memory_space<vmem>>, vector<1x1x10x4xf32>,
    %cst_9 = arith.constant 0.000000e+00 : f32
    %11 = vector.broadcast %cst_9 : f32 to vector<1x1x10x4xf32>
    %c0_10 = arith.constant 0 : index
    %c9 = arith.constant 9 : index
    %c0_11 = arith.constant 0 : index
    %c0_12 = arith.constant 0 : index
    %12 = vector.load %arg7[%c0_10, %c9, %c0_11, %c0_12] : memref<1x10x10x4xf32, #tpu.memory_space<vmem>>, vector<1x1x10x4xf32>
    tpu.vector_store %arg7[%c0_10, %c9, %c0_11, %c0_12], %11 {strides = array<i32>} : memref<1x10x10x4xf32, #tpu.memory_space<vmem>>, vector<1x1x10x4xf32>,
    %cst_13 = arith.constant 0.000000e+00 : f32
    %13 = vector.broadcast %cst_13 : f32 to vector<1x10x1x4xf32>
    %c0_14 = arith.constant 0 : index
    %c0_15 = arith.constant 0 : index
    %c0_16 = arith.constant 0 : index
    %c0_17 = arith.constant 0 : index
    %14 = vector.load %arg7[%c0_14, %c0_15, %c0_16, %c0_17] : memref<1x10x10x4xf32, #tpu.memory_space<vmem>>, vector<1x10x1x4xf32>
    tpu.vector_store %arg7[%c0_14, %c0_15, %c0_16, %c0_17], %13 {strides = array<i32>} : memref<1x10x10x4xf32, #tpu.memory_space<vmem>>, vector<1x10x1x4xf32>,
    %cst_18 = arith.constant 0.000000e+00 : f32
    %15 = vector.broadcast %cst_18 : f32 to vector<1x10x1x4xf32>
    %c0_19 = arith.constant 0 : index
    %c0_20 = arith.constant 0 : index
    %c9_21 = arith.constant 9 : index
    %c0_22 = arith.constant 0 : index
    %16 = vector.load %arg7[%c0_19, %c0_20, %c9_21, %c0_22] : memref<1x10x10x4xf32, #tpu.memory_space<vmem>>, vector<1x10x1x4xf32>
    tpu.vector_store %arg7[%c0_19, %c0_20, %c9_21, %c0_22], %15 {strides = array<i32>} : memref<1x10x10x4xf32, #tpu.memory_space<vmem>>, vector<1x10x1x4xf32>,
    %c0_23 = arith.constant 0 : index
    %c1 = arith.constant 1 : index
    %c1_24 = arith.constant 1 : index
    %c0_25 = arith.constant 0 : index
    %17 = vector.load %arg7[%c0_23, %c1, %c1_24, %c0_25] : memref<1x10x10x4xf32, #tpu.memory_space<vmem>>, vector<1x8x8x4xf32>
    tpu.vector_store %arg7[%c0_23, %c1, %c1_24, %c0_25], %8 {strides = array<i32>} : memref<1x10x10x4xf32, #tpu.memory_space<vmem>>, vector<1x8x8x4xf32>,
    %c0_26 = arith.constant 0 : index
    %c0_27 = arith.constant 0 : index
    %c0_28 = arith.constant 0 : index
    %c0_29 = arith.constant 0 : index
    %18 = vector.load %arg7[%c0_26, %c0_27, %c0_28, %c0_29] : memref<1x10x10x4xf32, #tpu.memory_space<vmem>>, vector<1x10x10x4xf32>
    %cst_30 = arith.constant 0.000000e+00 : f32
    %19 = vector.broadcast %cst_30 : f32 to vector<64x8xf32>
    %20 = vector.extract_strided_slice %18 {offsets = [0, 0, 0, 0], sizes = [1, 8, 8, 4], strides = [1, 1, 1, 1]} : vector<1x10x10x4xf32> to vector<1x8x8x4xf32>
    %21 = vector.shape_cast %20 : vector<1x8x8x4xf32> to vector<64x4xf32>
    %22 = arith.truncf %21 : vector<64x4xf32> to vector<64x4xbf16>
    %c0_31 = arith.constant 0 : index
    %c0_32 = arith.constant 0 : index
    %c0_33 = arith.constant 0 : index
    %23 = vector.load %arg2[%c0_31, %c0_32, %c0_33] : memref<9x4x8xbf16, #tpu.memory_space<vmem>>, vector<1x4x8xbf16>
    %24 = vector.shape_cast %23 : vector<1x4x8xbf16> to vector<4x8xbf16>
    %cst_34 = arith.constant dense<0.000000e+00> : vector<64x8xf32>
    %25 = tpu.matmul %22, %24, %cst_34 {dimension_numbers = #tpu.dot_dimension_numbers<[1], [0], [0], [1], [0, 0, 1, 1], [], []>} : vector<64x4xbf16>, vector<4x8xbf16>, vector<64x8xf32> -> vector<64x8xf32>
    %26 = arith.addf %19, %25 : vector<64x8xf32>
    %27 = vector.extract_strided_slice %18 {offsets = [0, 0, 1, 0], sizes = [1, 8, 8, 4], strides = [1, 1, 1, 1]} : vector<1x10x10x4xf32> to vector<1x8x8x4xf32>
    %28 = vector.shape_cast %27 : vector<1x8x8x4xf32> to vector<64x4xf32>
    %29 = arith.truncf %28 : vector<64x4xf32> to vector<64x4xbf16>
    %c1_35 = arith.constant 1 : index
    %c0_36 = arith.constant 0 : index
    %c0_37 = arith.constant 0 : index
    %30 = vector.load %arg2[%c1_35, %c0_36, %c0_37] : memref<9x4x8xbf16, #tpu.memory_space<vmem>>, vector<1x4x8xbf16>
    %31 = vector.shape_cast %30 : vector<1x4x8xbf16> to vector<4x8xbf16>
    %cst_38 = arith.constant dense<0.000000e+00> : vector<64x8xf32>
    %32 = tpu.matmul %29, %31, %cst_38 {dimension_numbers = #tpu.dot_dimension_numbers<[1], [0], [0], [1], [0, 0, 1, 1], [], []>} : vector<64x4xbf16>, vector<4x8xbf16>, vector<64x8xf32> -> vector<64x8xf32>
    %33 = arith.addf %26, %32 : vector<64x8xf32>
    %34 = vector.extract_strided_slice %18 {offsets = [0, 0, 2, 0], sizes = [1, 8, 8, 4], strides = [1, 1, 1, 1]} : vector<1x10x10x4xf32> to vector<1x8x8x4xf32>
    %35 = vector.shape_cast %34 : vector<1x8x8x4xf32> to vector<64x4xf32>
    %36 = arith.truncf %35 : vector<64x4xf32> to vector<64x4xbf16>
    %c2 = arith.constant 2 : index
    %c0_39 = arith.constant 0 : index
    %c0_40 = arith.constant 0 : index
    %37 = vector.load %arg2[%c2, %c0_39, %c0_40] : memref<9x4x8xbf16, #tpu.memory_space<vmem>>, vector<1x4x8xbf16>
    %38 = vector.shape_cast %37 : vector<1x4x8xbf16> to vector<4x8xbf16>
    %cst_41 = arith.constant dense<0.000000e+00> : vector<64x8xf32>
    %39 = tpu.matmul %36, %38, %cst_41 {dimension_numbers = #tpu.dot_dimension_numbers<[1], [0], [0], [1], [0, 0, 1, 1], [], []>} : vector<64x4xbf16>, vector<4x8xbf16>, vector<64x8xf32> -> vector<64x8xf32>
    %40 = arith.addf %33, %39 : vector<64x8xf32>
    %41 = vector.extract_strided_slice %18 {offsets = [0, 1, 0, 0], sizes = [1, 8, 8, 4], strides = [1, 1, 1, 1]} : vector<1x10x10x4xf32> to vector<1x8x8x4xf32>
    %42 = vector.shape_cast %41 : vector<1x8x8x4xf32> to vector<64x4xf32>
    %43 = arith.truncf %42 : vector<64x4xf32> to vector<64x4xbf16>
    %c3 = arith.constant 3 : index
    %c0_42 = arith.constant 0 : index
    %c0_43 = arith.constant 0 : index
    %44 = vector.load %arg2[%c3, %c0_42, %c0_43] : memref<9x4x8xbf16, #tpu.memory_space<vmem>>, vector<1x4x8xbf16>
    %45 = vector.shape_cast %44 : vector<1x4x8xbf16> to vector<4x8xbf16>
    %cst_44 = arith.constant dense<0.000000e+00> : vector<64x8xf32>
    %46 = tpu.matmul %43, %45, %cst_44 {dimension_numbers = #tpu.dot_dimension_numbers<[1], [0], [0], [1], [0, 0, 1, 1], [], []>} : vector<64x4xbf16>, vector<4x8xbf16>, vector<64x8xf32> -> vector<64x8xf32>
    %47 = arith.addf %40, %46 : vector<64x8xf32>
    %48 = vector.extract_strided_slice %18 {offsets = [0, 1, 1, 0], sizes = [1, 8, 8, 4], strides = [1, 1, 1, 1]} : vector<1x10x10x4xf32> to vector<1x8x8x4xf32>
    %49 = vector.shape_cast %48 : vector<1x8x8x4xf32> to vector<64x4xf32>
    %50 = arith.truncf %49 : vector<64x4xf32> to vector<64x4xbf16>
    %c4 = arith.constant 4 : index
    %c0_45 = arith.constant 0 : index
    %c0_46 = arith.constant 0 : index
    %51 = vector.load %arg2[%c4, %c0_45, %c0_46] : memref<9x4x8xbf16, #tpu.memory_space<vmem>>, vector<1x4x8xbf16>
    %52 = vector.shape_cast %51 : vector<1x4x8xbf16> to vector<4x8xbf16>
    %cst_47 = arith.constant dense<0.000000e+00> : vector<64x8xf32>
    %53 = tpu.matmul %50, %52, %cst_47 {dimension_numbers = #tpu.dot_dimension_numbers<[1], [0], [0], [1], [0, 0, 1, 1], [], []>} : vector<64x4xbf16>, vector<4x8xbf16>, vector<64x8xf32> -> vector<64x8xf32>
    %54 = arith.addf %47, %53 : vector<64x8xf32>
    %55 = vector.extract_strided_slice %18 {offsets = [0, 1, 2, 0], sizes = [1, 8, 8, 4], strides = [1, 1, 1, 1]} : vector<1x10x10x4xf32> to vector<1x8x8x4xf32>
    %56 = vector.shape_cast %55 : vector<1x8x8x4xf32> to vector<64x4xf32>
    %57 = arith.truncf %56 : vector<64x4xf32> to vector<64x4xbf16>
    %c5 = arith.constant 5 : index
    %c0_48 = arith.constant 0 : index
    %c0_49 = arith.constant 0 : index
    %58 = vector.load %arg2[%c5, %c0_48, %c0_49] : memref<9x4x8xbf16, #tpu.memory_space<vmem>>, vector<1x4x8xbf16>
    %59 = vector.shape_cast %58 : vector<1x4x8xbf16> to vector<4x8xbf16>
    %cst_50 = arith.constant dense<0.000000e+00> : vector<64x8xf32>
    %60 = tpu.matmul %57, %59, %cst_50 {dimension_numbers = #tpu.dot_dimension_numbers<[1], [0], [0], [1], [0, 0, 1, 1], [], []>} : vector<64x4xbf16>, vector<4x8xbf16>, vector<64x8xf32> -> vector<64x8xf32>
    %61 = arith.addf %54, %60 : vector<64x8xf32>
    %62 = vector.extract_strided_slice %18 {offsets = [0, 2, 0, 0], sizes = [1, 8, 8, 4], strides = [1, 1, 1, 1]} : vector<1x10x10x4xf32> to vector<1x8x8x4xf32>
    %63 = vector.shape_cast %62 : vector<1x8x8x4xf32> to vector<64x4xf32>
    %64 = arith.truncf %63 : vector<64x4xf32> to vector<64x4xbf16>
    %c6 = arith.constant 6 : index
    %c0_51 = arith.constant 0 : index
    %c0_52 = arith.constant 0 : index
    %65 = vector.load %arg2[%c6, %c0_51, %c0_52] : memref<9x4x8xbf16, #tpu.memory_space<vmem>>, vector<1x4x8xbf16>
    %66 = vector.shape_cast %65 : vector<1x4x8xbf16> to vector<4x8xbf16>
    %cst_53 = arith.constant dense<0.000000e+00> : vector<64x8xf32>
    %67 = tpu.matmul %64, %66, %cst_53 {dimension_numbers = #tpu.dot_dimension_numbers<[1], [0], [0], [1], [0, 0, 1, 1], [], []>} : vector<64x4xbf16>, vector<4x8xbf16>, vector<64x8xf32> -> vector<64x8xf32>
    %68 = arith.addf %61, %67 : vector<64x8xf32>
    %69 = vector.extract_strided_slice %18 {offsets = [0, 2, 1, 0], sizes = [1, 8, 8, 4], strides = [1, 1, 1, 1]} : vector<1x10x10x4xf32> to vector<1x8x8x4xf32>
    %70 = vector.shape_cast %69 : vector<1x8x8x4xf32> to vector<64x4xf32>
    %71 = arith.truncf %70 : vector<64x4xf32> to vector<64x4xbf16>
    %c7 = arith.constant 7 : index
    %c0_54 = arith.constant 0 : index
    %c0_55 = arith.constant 0 : index
    %72 = vector.load %arg2[%c7, %c0_54, %c0_55] : memref<9x4x8xbf16, #tpu.memory_space<vmem>>, vector<1x4x8xbf16>
    %73 = vector.shape_cast %72 : vector<1x4x8xbf16> to vector<4x8xbf16>
    %cst_56 = arith.constant dense<0.000000e+00> : vector<64x8xf32>
    %74 = tpu.matmul %71, %73, %cst_56 {dimension_numbers = #tpu.dot_dimension_numbers<[1], [0], [0], [1], [0, 0, 1, 1], [], []>} : vector<64x4xbf16>, vector<4x8xbf16>, vector<64x8xf32> -> vector<64x8xf32>
    %75 = arith.addf %68, %74 : vector<64x8xf32>
    %76 = vector.extract_strided_slice %18 {offsets = [0, 2, 2, 0], sizes = [1, 8, 8, 4], strides = [1, 1, 1, 1]} : vector<1x10x10x4xf32> to vector<1x8x8x4xf32>
    %77 = vector.shape_cast %76 : vector<1x8x8x4xf32> to vector<64x4xf32>
    %78 = arith.truncf %77 : vector<64x4xf32> to vector<64x4xbf16>
    %c8 = arith.constant 8 : index
    %c0_57 = arith.constant 0 : index
    %c0_58 = arith.constant 0 : index
    %79 = vector.load %arg2[%c8, %c0_57, %c0_58] : memref<9x4x8xbf16, #tpu.memory_space<vmem>>, vector<1x4x8xbf16>
    %80 = vector.shape_cast %79 : vector<1x4x8xbf16> to vector<4x8xbf16>
    %cst_59 = arith.constant dense<0.000000e+00> : vector<64x8xf32>
    %81 = tpu.matmul %78, %80, %cst_59 {dimension_numbers = #tpu.dot_dimension_numbers<[1], [0], [0], [1], [0, 0, 1, 1], [], []>} : vector<64x4xbf16>, vector<4x8xbf16>, vector<64x8xf32> -> vector<64x8xf32>
    %82 = arith.addf %75, %81 : vector<64x8xf32>
    %c0_60 = arith.constant 0 : index
    %c0_61 = arith.constant 0 : index
    %83 = vector.load %arg3[%c0_60, %c0_61] : memref<1x8xf32, #tpu.memory_space<vmem>>, vector<1x8xf32>
    %84 = vector.broadcast %83 : vector<1x8xf32> to vector<64x8xf32>
    %85 = arith.addf %82, %84 : vector<64x8xf32>
    %cst_62 = arith.constant 0.000000e+00 : f32
    %86 = vector.broadcast %cst_62 : f32 to vector<64x8xf32>
    %87 = arith.maximumf %85, %86 : vector<64x8xf32>
    %88 = vector.shape_cast %87 : vector<64x8xf32> to vector<1x8x8x8xf32>
    %cst_63 = arith.constant 0.000000e+00 : f32
    %89 = vector.broadcast %cst_63 : f32 to vector<1x1x10x8xf32>
    %c0_64 = arith.constant 0 : index
    %c0_65 = arith.constant 0 : index
    %c0_66 = arith.constant 0 : index
    %c0_67 = arith.constant 0 : index
    %90 = vector.load %arg8[%c0_64, %c0_65, %c0_66, %c0_67] : memref<1x10x10x8xf32, #tpu.memory_space<vmem>>, vector<1x1x10x8xf32>
    tpu.vector_store %arg8[%c0_64, %c0_65, %c0_66, %c0_67], %89 {strides = array<i32>} : memref<1x10x10x8xf32, #tpu.memory_space<vmem>>, vector<1x1x10x8xf32>,
    %cst_68 = arith.constant 0.000000e+00 : f32
    %91 = vector.broadcast %cst_68 : f32 to vector<1x1x10x8xf32>
    %c0_69 = arith.constant 0 : index
    %c9_70 = arith.constant 9 : index
    %c0_71 = arith.constant 0 : index
    %c0_72 = arith.constant 0 : index
    %92 = vector.load %arg8[%c0_69, %c9_70, %c0_71, %c0_72] : memref<1x10x10x8xf32, #tpu.memory_space<vmem>>, vector<1x1x10x8xf32>
    tpu.vector_store %arg8[%c0_69, %c9_70, %c0_71, %c0_72], %91 {strides = array<i32>} : memref<1x10x10x8xf32, #tpu.memory_space<vmem>>, vector<1x1x10x8xf32>,
    %cst_73 = arith.constant 0.000000e+00 : f32
    %93 = vector.broadcast %cst_73 : f32 to vector<1x10x1x8xf32>
    %c0_74 = arith.constant 0 : index
    %c0_75 = arith.constant 0 : index
    %c0_76 = arith.constant 0 : index
    %c0_77 = arith.constant 0 : index
    %94 = vector.load %arg8[%c0_74, %c0_75, %c0_76, %c0_77] : memref<1x10x10x8xf32, #tpu.memory_space<vmem>>, vector<1x10x1x8xf32>
    tpu.vector_store %arg8[%c0_74, %c0_75, %c0_76, %c0_77], %93 {strides = array<i32>} : memref<1x10x10x8xf32, #tpu.memory_space<vmem>>, vector<1x10x1x8xf32>,
    %cst_78 = arith.constant 0.000000e+00 : f32
    %95 = vector.broadcast %cst_78 : f32 to vector<1x10x1x8xf32>
    %c0_79 = arith.constant 0 : index
    %c0_80 = arith.constant 0 : index
    %c9_81 = arith.constant 9 : index
    %c0_82 = arith.constant 0 : index
    %96 = vector.load %arg8[%c0_79, %c0_80, %c9_81, %c0_82] : memref<1x10x10x8xf32, #tpu.memory_space<vmem>>, vector<1x10x1x8xf32>
    tpu.vector_store %arg8[%c0_79, %c0_80, %c9_81, %c0_82], %95 {strides = array<i32>} : memref<1x10x10x8xf32, #tpu.memory_space<vmem>>, vector<1x10x1x8xf32>,
    %c0_83 = arith.constant 0 : index
    %c1_84 = arith.constant 1 : index
    %c1_85 = arith.constant 1 : index
    %c0_86 = arith.constant 0 : index
    %97 = vector.load %arg8[%c0_83, %c1_84, %c1_85, %c0_86] : memref<1x10x10x8xf32, #tpu.memory_space<vmem>>, vector<1x8x8x8xf32>
    tpu.vector_store %arg8[%c0_83, %c1_84, %c1_85, %c0_86], %88 {strides = array<i32>} : memref<1x10x10x8xf32, #tpu.memory_space<vmem>>, vector<1x8x8x8xf32>,
    %c0_87 = arith.constant 0 : index
    %c0_88 = arith.constant 0 : index
    %c0_89 = arith.constant 0 : index
    %c0_90 = arith.constant 0 : index
    %98 = vector.load %arg8[%c0_87, %c0_88, %c0_89, %c0_90] : memref<1x10x10x8xf32, #tpu.memory_space<vmem>>, vector<1x10x10x8xf32>
    %cst_91 = arith.constant 0.000000e+00 : f32
    %99 = vector.broadcast %cst_91 : f32 to vector<64x8xf32>
    %100 = vector.extract_strided_slice %98 {offsets = [0, 0, 0, 0], sizes = [1, 8, 8, 8], strides = [1, 1, 1, 1]} : vector<1x10x10x8xf32> to vector<1x8x8x8xf32>
    %101 = vector.shape_cast %100 : vector<1x8x8x8xf32> to vector<64x8xf32>
    %102 = arith.truncf %101 : vector<64x8xf32> to vector<64x8xbf16>
    %c0_92 = arith.constant 0 : index
    %c0_93 = arith.constant 0 : index
    %c0_94 = arith.constant 0 : index
    %103 = vector.load %arg4[%c0_92, %c0_93, %c0_94] : memref<9x8x8xbf16, #tpu.memory_space<vmem>>, vector<1x8x8xbf16>
    %104 = vector.shape_cast %103 : vector<1x8x8xbf16> to vector<8x8xbf16>
    %cst_95 = arith.constant dense<0.000000e+00> : vector<64x8xf32>
    %105 = tpu.matmul %102, %104, %cst_95 {dimension_numbers = #tpu.dot_dimension_numbers<[1], [0], [0], [1], [0, 0, 1, 1], [], []>} : vector<64x8xbf16>, vector<8x8xbf16>, vector<64x8xf32> -> vector<64x8xf32>
    %106 = arith.addf %99, %105 : vector<64x8xf32>
    %107 = vector.extract_strided_slice %98 {offsets = [0, 0, 1, 0], sizes = [1, 8, 8, 8], strides = [1, 1, 1, 1]} : vector<1x10x10x8xf32> to vector<1x8x8x8xf32>
    %108 = vector.shape_cast %107 : vector<1x8x8x8xf32> to vector<64x8xf32>
    %109 = arith.truncf %108 : vector<64x8xf32> to vector<64x8xbf16>
    %c1_96 = arith.constant 1 : index
    %c0_97 = arith.constant 0 : index
    %c0_98 = arith.constant 0 : index
    %110 = vector.load %arg4[%c1_96, %c0_97, %c0_98] : memref<9x8x8xbf16, #tpu.memory_space<vmem>>, vector<1x8x8xbf16>
    %111 = vector.shape_cast %110 : vector<1x8x8xbf16> to vector<8x8xbf16>
    %cst_99 = arith.constant dense<0.000000e+00> : vector<64x8xf32>
    %112 = tpu.matmul %109, %111, %cst_99 {dimension_numbers = #tpu.dot_dimension_numbers<[1], [0], [0], [1], [0, 0, 1, 1], [], []>} : vector<64x8xbf16>, vector<8x8xbf16>, vector<64x8xf32> -> vector<64x8xf32>
    %113 = arith.addf %106, %112 : vector<64x8xf32>
    %114 = vector.extract_strided_slice %98 {offsets = [0, 0, 2, 0], sizes = [1, 8, 8, 8], strides = [1, 1, 1, 1]} : vector<1x10x10x8xf32> to vector<1x8x8x8xf32>
    %115 = vector.shape_cast %114 : vector<1x8x8x8xf32> to vector<64x8xf32>
    %116 = arith.truncf %115 : vector<64x8xf32> to vector<64x8xbf16>
    %c2_100 = arith.constant 2 : index
    %c0_101 = arith.constant 0 : index
    %c0_102 = arith.constant 0 : index
    %117 = vector.load %arg4[%c2_100, %c0_101, %c0_102] : memref<9x8x8xbf16, #tpu.memory_space<vmem>>, vector<1x8x8xbf16>
    %118 = vector.shape_cast %117 : vector<1x8x8xbf16> to vector<8x8xbf16>
    %cst_103 = arith.constant dense<0.000000e+00> : vector<64x8xf32>
    %119 = tpu.matmul %116, %118, %cst_103 {dimension_numbers = #tpu.dot_dimension_numbers<[1], [0], [0], [1], [0, 0, 1, 1], [], []>} : vector<64x8xbf16>, vector<8x8xbf16>, vector<64x8xf32> -> vector<64x8xf32>
    %120 = arith.addf %113, %119 : vector<64x8xf32>
    %121 = vector.extract_strided_slice %98 {offsets = [0, 1, 0, 0], sizes = [1, 8, 8, 8], strides = [1, 1, 1, 1]} : vector<1x10x10x8xf32> to vector<1x8x8x8xf32>
    %122 = vector.shape_cast %121 : vector<1x8x8x8xf32> to vector<64x8xf32>
    %123 = arith.truncf %122 : vector<64x8xf32> to vector<64x8xbf16>
    %c3_104 = arith.constant 3 : index
    %c0_105 = arith.constant 0 : index
    %c0_106 = arith.constant 0 : index
    %124 = vector.load %arg4[%c3_104, %c0_105, %c0_106] : memref<9x8x8xbf16, #tpu.memory_space<vmem>>, vector<1x8x8xbf16>
    %125 = vector.shape_cast %124 : vector<1x8x8xbf16> to vector<8x8xbf16>
    %cst_107 = arith.constant dense<0.000000e+00> : vector<64x8xf32>
    %126 = tpu.matmul %123, %125, %cst_107 {dimension_numbers = #tpu.dot_dimension_numbers<[1], [0], [0], [1], [0, 0, 1, 1], [], []>} : vector<64x8xbf16>, vector<8x8xbf16>, vector<64x8xf32> -> vector<64x8xf32>
    %127 = arith.addf %120, %126 : vector<64x8xf32>
    %128 = vector.extract_strided_slice %98 {offsets = [0, 1, 1, 0], sizes = [1, 8, 8, 8], strides = [1, 1, 1, 1]} : vector<1x10x10x8xf32> to vector<1x8x8x8xf32>
    %129 = vector.shape_cast %128 : vector<1x8x8x8xf32> to vector<64x8xf32>
    %130 = arith.truncf %129 : vector<64x8xf32> to vector<64x8xbf16>
    %c4_108 = arith.constant 4 : index
    %c0_109 = arith.constant 0 : index
    %c0_110 = arith.constant 0 : index
    %131 = vector.load %arg4[%c4_108, %c0_109, %c0_110] : memref<9x8x8xbf16, #tpu.memory_space<vmem>>, vector<1x8x8xbf16>
    %132 = vector.shape_cast %131 : vector<1x8x8xbf16> to vector<8x8xbf16>
    %cst_111 = arith.constant dense<0.000000e+00> : vector<64x8xf32>
    %133 = tpu.matmul %130, %132, %cst_111 {dimension_numbers = #tpu.dot_dimension_numbers<[1], [0], [0], [1], [0, 0, 1, 1], [], []>} : vector<64x8xbf16>, vector<8x8xbf16>, vector<64x8xf32> -> vector<64x8xf32>
    %134 = arith.addf %127, %133 : vector<64x8xf32>
    %135 = vector.extract_strided_slice %98 {offsets = [0, 1, 2, 0], sizes = [1, 8, 8, 8], strides = [1, 1, 1, 1]} : vector<1x10x10x8xf32> to vector<1x8x8x8xf32>
    %136 = vector.shape_cast %135 : vector<1x8x8x8xf32> to vector<64x8xf32>
    %137 = arith.truncf %136 : vector<64x8xf32> to vector<64x8xbf16>
    %c5_112 = arith.constant 5 : index
    %c0_113 = arith.constant 0 : index
    %c0_114 = arith.constant 0 : index
    %138 = vector.load %arg4[%c5_112, %c0_113, %c0_114] : memref<9x8x8xbf16, #tpu.memory_space<vmem>>, vector<1x8x8xbf16>
    %139 = vector.shape_cast %138 : vector<1x8x8xbf16> to vector<8x8xbf16>
    %cst_115 = arith.constant dense<0.000000e+00> : vector<64x8xf32>
    %140 = tpu.matmul %137, %139, %cst_115 {dimension_numbers = #tpu.dot_dimension_numbers<[1], [0], [0], [1], [0, 0, 1, 1], [], []>} : vector<64x8xbf16>, vector<8x8xbf16>, vector<64x8xf32> -> vector<64x8xf32>
    %141 = arith.addf %134, %140 : vector<64x8xf32>
    %142 = vector.extract_strided_slice %98 {offsets = [0, 2, 0, 0], sizes = [1, 8, 8, 8], strides = [1, 1, 1, 1]} : vector<1x10x10x8xf32> to vector<1x8x8x8xf32>
    %143 = vector.shape_cast %142 : vector<1x8x8x8xf32> to vector<64x8xf32>
    %144 = arith.truncf %143 : vector<64x8xf32> to vector<64x8xbf16>
    %c6_116 = arith.constant 6 : index
    %c0_117 = arith.constant 0 : index
    %c0_118 = arith.constant 0 : index
    %145 = vector.load %arg4[%c6_116, %c0_117, %c0_118] : memref<9x8x8xbf16, #tpu.memory_space<vmem>>, vector<1x8x8xbf16>
    %146 = vector.shape_cast %145 : vector<1x8x8xbf16> to vector<8x8xbf16>
    %cst_119 = arith.constant dense<0.000000e+00> : vector<64x8xf32>
    %147 = tpu.matmul %144, %146, %cst_119 {dimension_numbers = #tpu.dot_dimension_numbers<[1], [0], [0], [1], [0, 0, 1, 1], [], []>} : vector<64x8xbf16>, vector<8x8xbf16>, vector<64x8xf32> -> vector<64x8xf32>
    %148 = arith.addf %141, %147 : vector<64x8xf32>
    %149 = vector.extract_strided_slice %98 {offsets = [0, 2, 1, 0], sizes = [1, 8, 8, 8], strides = [1, 1, 1, 1]} : vector<1x10x10x8xf32> to vector<1x8x8x8xf32>
    %150 = vector.shape_cast %149 : vector<1x8x8x8xf32> to vector<64x8xf32>
    %151 = arith.truncf %150 : vector<64x8xf32> to vector<64x8xbf16>
    %c7_120 = arith.constant 7 : index
    %c0_121 = arith.constant 0 : index
    %c0_122 = arith.constant 0 : index
    %152 = vector.load %arg4[%c7_120, %c0_121, %c0_122] : memref<9x8x8xbf16, #tpu.memory_space<vmem>>, vector<1x8x8xbf16>
    %153 = vector.shape_cast %152 : vector<1x8x8xbf16> to vector<8x8xbf16>
    %cst_123 = arith.constant dense<0.000000e+00> : vector<64x8xf32>
    %154 = tpu.matmul %151, %153, %cst_123 {dimension_numbers = #tpu.dot_dimension_numbers<[1], [0], [0], [1], [0, 0, 1, 1], [], []>} : vector<64x8xbf16>, vector<8x8xbf16>, vector<64x8xf32> -> vector<64x8xf32>
    %155 = arith.addf %148, %154 : vector<64x8xf32>
    %156 = vector.extract_strided_slice %98 {offsets = [0, 2, 2, 0], sizes = [1, 8, 8, 8], strides = [1, 1, 1, 1]} : vector<1x10x10x8xf32> to vector<1x8x8x8xf32>
    %157 = vector.shape_cast %156 : vector<1x8x8x8xf32> to vector<64x8xf32>
    %158 = arith.truncf %157 : vector<64x8xf32> to vector<64x8xbf16>
    %c8_124 = arith.constant 8 : index
    %c0_125 = arith.constant 0 : index
    %c0_126 = arith.constant 0 : index
    %159 = vector.load %arg4[%c8_124, %c0_125, %c0_126] : memref<9x8x8xbf16, #tpu.memory_space<vmem>>, vector<1x8x8xbf16>
    %160 = vector.shape_cast %159 : vector<1x8x8xbf16> to vector<8x8xbf16>
    %cst_127 = arith.constant dense<0.000000e+00> : vector<64x8xf32>
    %161 = tpu.matmul %158, %160, %cst_127 {dimension_numbers = #tpu.dot_dimension_numbers<[1], [0], [0], [1], [0, 0, 1, 1], [], []>} : vector<64x8xbf16>, vector<8x8xbf16>, vector<64x8xf32> -> vector<64x8xf32>
    %162 = arith.addf %155, %161 : vector<64x8xf32>
    %c0_128 = arith.constant 0 : index
    %c0_129 = arith.constant 0 : index
    %163 = vector.load %arg5[%c0_128, %c0_129] : memref<1x8xf32, #tpu.memory_space<vmem>>, vector<1x8xf32>
    %164 = vector.broadcast %163 : vector<1x8xf32> to vector<64x8xf32>
    %165 = arith.addf %162, %164 : vector<64x8xf32>
    %cst_130 = arith.constant 0.000000e+00 : f32
    %166 = vector.broadcast %cst_130 : f32 to vector<64x8xf32>
    %167 = arith.maximumf %165, %166 : vector<64x8xf32>
    %168 = vector.shape_cast %167 : vector<64x8xf32> to vector<1x8x8x8xf32>
    %c0_131 = arith.constant 0 : index
    %c0_132 = arith.constant 0 : index
    %c0_133 = arith.constant 0 : index
    %c0_134 = arith.constant 0 : index
    %169 = vector.load %arg6[%c0_131, %c0_132, %c0_133, %c0_134] : memref<1x8x8x8xf32, #tpu.memory_space<vmem>>, vector<1x8x8x8xf32>
    tpu.vector_store %arg6[%c0_131, %c0_132, %c0_133, %c0_134], %168 {strides = array<i32>} : memref<1x8x8x8xf32, #tpu.memory_space<vmem>>, vector<1x8x8x8xf32>,
    return
  }
  func.func @transform_0(%arg0: i32) -> (i32, i32, i32, i32, i32, i32) {
    %c0_i32 = arith.constant 0 : i32
    %c0_i32_0 = arith.constant 0 : i32
    %c0_i32_1 = arith.constant 0 : i32
    %c0_i32_2 = arith.constant 0 : i32
    %c0_i32_3 = arith.constant 0 : i32
    %c0_i32_4 = arith.constant 0 : i32
    return %arg0, %c0_i32, %c0_i32_0, %c0_i32_1, %c0_i32_2, %c0_i32_3 : i32, i32, i32, i32, i32, i32
  }
  func.func @transform_1(%arg0: i32) -> (i32, i32, i32) {
    %c0_i32 = arith.constant 0 : i32
    %c0_i32_0 = arith.constant 0 : i32
    %c0_i32_1 = arith.constant 0 : i32
    %c0_i32_2 = arith.constant 0 : i32
    return %c0_i32, %c0_i32_0, %c0_i32_1 : i32, i32, i32
  }
  func.func @transform_2(%arg0: i32) -> (i32, i32) {
    %c0_i32 = arith.constant 0 : i32
    %c0_i32_0 = arith.constant 0 : i32
    %c0_i32_1 = arith.constant 0 : i32
    return %c0_i32, %c0_i32_0 : i32, i32
  }
  func.func @transform_3(%arg0: i32) -> (i32, i32, i32) {
    %c0_i32 = arith.constant 0 : i32
    %c0_i32_0 = arith.constant 0 : i32
    %c0_i32_1 = arith.constant 0 : i32
    %c0_i32_2 = arith.constant 0 : i32
    return %c0_i32, %c0_i32_0, %c0_i32_1 : i32, i32, i32
  }
  func.func @transform_4(%arg0: i32) -> (i32, i32) {
    %c0_i32 = arith.constant 0 : i32
    %c0_i32_0 = arith.constant 0 : i32
    %c0_i32_1 = arith.constant 0 : i32
    return %c0_i32, %c0_i32_0 : i32, i32
  }
  func.func @transform_5(%arg0: i32) -> (i32, i32, i32, i32) {
    %c0_i32 = arith.constant 0 : i32
    %c0_i32_0 = arith.constant 0 : i32
    %c0_i32_1 = arith.constant 0 : i32
    %c0_i32_2 = arith.constant 0 : i32
    return %arg0, %c0_i32, %c0_i32_0, %c0_i32_1 : i32, i32, i32, i32
  }
}

</mosaic_0001>

<llo_original>
// kernel: down_sample_forward.1
$region0: #{down_sample_forward.1}
  #allocation0 [shape = 'u32[]', space=smem, size = 0x4, offset = 0x4, fixed_abs, tag = 'smem constant byte address 0x4 - core index']
  #allocation1 [shape = 'u32[72,128]{1,0:T(1,128)}', space=vmem, size = 0x9000, scoped, tag = 'internal scratch']
  #allocation2 [shape = 'f32[1,10,10,4]{3,2,1,0:T(8,128)}', space=vmem, size = 0x14000, scoped, tag = 'scratch operand']
  #allocation3 [shape = 'f32[1,10,10,8]{3,2,1,0:T(8,128)}', space=vmem, size = 0x14000, scoped, tag = 'scratch operand']
  %s0 = inlined_call_operand.vmem [shape: f32[2,8,2,8,2,4], index: 0, kind: input, shape index: {}]
  %s1 = inlined_call_operand.vmem [shape: bf16[9,4,8], index: 1, kind: input, shape index: {}]
  %s2 = inlined_call_operand.vmem [shape: f32[1,8], index: 2, kind: input, shape index: {}]
  %s3 = inlined_call_operand.vmem [shape: bf16[9,8,8], index: 3, kind: input, shape index: {}]
  %s4 = inlined_call_operand.vmem [shape: f32[1,8], index: 4, kind: input, shape index: {}]
  %s5 = inlined_call_operand.vmem [shape: f32[2,8,8,8], index: 5, kind: output, shape index: {}]
  %s6 = sld [smem:[#allocation0]]
  $region53: #{down_sample_forward.1} parent=0
    _
  %s8 = ssub.s32 1, %s6
  %s9 = scalar_select 0, %s8, %s6
  loop: start=0, step=1, limit=4
  $region2: #{down_sample_forward.1} parent=0 // loop_pre_header
    _
  $region3: #{down_sample_forward.1} parent=0 // loop_header
    %s11 = sphi 0, %s15
    %p12 = scmp.ge.s32.totalorder %s11, 4
    %s21 = sphi 0, %s23
    %s24 = sphi 0, %s21
    %s25 = sphi 0, %s24
    %s41 = sphi 0, %s25
    %s45 = sphi 0, %s45
    %s47 = sphi 0, %s45
    %s48 = sphi 0, %s47
    %s62 = sphi 0, %s48
    %s66 = sphi 0, %s66
    %s68 = sphi 0, %s66
    %s69 = sphi 0, %s68
    %s83 = sphi 0, %s69
    %s87 = sphi 0, %s87
    %s89 = sphi 0, %s87
    %s90 = sphi 0, %s89
    %s104 = sphi 0, %s90
    %s108 = sphi 0, %s108
    %s110 = sphi 0, %s108
    %s111 = sphi 0, %s110
    %s125 = sphi 0, %s111
    %s131 = sphi 0, %s133
    %s134 = sphi 0, %s131
    %s135 = sphi 0, %s134
    %s151 = sphi 0, %s135
  $region4: #{down_sample_forward.1} parent=0 // loop_header_branch
    %14 = sbr.rel (%p12) target = $region8
  $region5: #{down_sample_forward.1} parent=0 // loop_body
    %s16 = ssub.s32 %s11, 1
    %s17 = ssub.s32 %s11, 2
    %s18 = sadd.s32 %s11, 1
    %s19 = ssub.s32 %s11, %s18
    %p20 = scmp.eq.s32.totalorder %s19, 0
    %s22 = sadd.s32 %s21, 1
    %s23 = scalar_select %p20, %s21, %s22
    %p26 = pneg %p20
    %p27 = scmp.eq.s32.totalorder %s11, 1
    %p28 = por %p26, %p27
    %p29 = scmp.ne.s32.totalorder %s21, %s24
    %p30 = scmp.eq.s32.totalorder %s11, 0
    %p31 = por %p29, %p30
    %p32 = scmp.ne.s32.totalorder %s21, %s24
    %p33 = scmp.eq.s32.totalorder %s16, 1
    %p34 = por %p32, %p33
    %p35 = scmp.ne.s32.totalorder %s24, %s25
    %p36 = scmp.eq.s32.totalorder %s16, 0
    %p37 = por %p35, %p36
    %p38 = scmp.ne.s32.totalorder %s24, %s25
    %p39 = scmp.eq.s32.totalorder %s17, 1
    %p40 = por %p38, %p39
    %p42 = scmp.ne.s32.totalorder %s25, %s41
    %p43 = scmp.eq.s32.totalorder %s17, 0
    %p44 = por %p42, %p43
    %s46 = sadd.s32 %s45, 1
    %p49 = scmp.eq.s32.totalorder %s11, 1
    %p50 = scmp.ne.s32.totalorder %s45, %s47
    %p51 = scmp.eq.s32.totalorder %s11, 0
    %p52 = por %p50, %p51
    %p53 = scmp.ne.s32.totalorder %s45, %s47
    %p54 = scmp.eq.s32.totalorder %s16, 1
    %p55 = por %p53, %p54
    %p56 = scmp.ne.s32.totalorder %s47, %s48
    %p57 = scmp.eq.s32.totalorder %s16, 0
    %p58 = por %p56, %p57
    %p59 = scmp.ne.s32.totalorder %s47, %s48
    %p60 = scmp.eq.s32.totalorder %s17, 1
    %p61 = por %p59, %p60
    %p63 = scmp.ne.s32.totalorder %s48, %s62
    %p64 = scmp.eq.s32.totalorder %s17, 0
    %p65 = por %p63, %p64
    %s67 = sadd.s32 %s66, 1
    %p70 = scmp.eq.s32.totalorder %s11, 1
    %p71 = scmp.ne.s32.totalorder %s66, %s68
    %p72 = scmp.eq.s32.totalorder %s11, 0
    %p73 = por %p71, %p72
    %p74 = scmp.ne.s32.totalorder %s66, %s68
    %p75 = scmp.eq.s32.totalorder %s16, 1
    %p76 = por %p74, %p75
    %p77 = scmp.ne.s32.totalorder %s68, %s69
    %p78 = scmp.eq.s32.totalorder %s16, 0
    %p79 = por %p77, %p78
    %p80 = scmp.ne.s32.totalorder %s68, %s69
    %p81 = scmp.eq.s32.totalorder %s17, 1
    %p82 = por %p80, %p81
    %p84 = scmp.ne.s32.totalorder %s69, %s83
    %p85 = scmp.eq.s32.totalorder %s17, 0
    %p86 = por %p84, %p85
    %s88 = sadd.s32 %s87, 1
    %p91 = scmp.eq.s32.totalorder %s11, 1
    %p92 = scmp.ne.s32.totalorder %s87, %s89
    %p93 = scmp.eq.s32.totalorder %s11, 0
    %p94 = por %p92, %p93
    %p95 = scmp.ne.s32.totalorder %s87, %s89
    %p96 = scmp.eq.s32.totalorder %s16, 1
    %p97 = por %p95, %p96
    %p98 = scmp.ne.s32.totalorder %s89, %s90
    %p99 = scmp.eq.s32.totalorder %s16, 0
    %p100 = por %p98, %p99
    %p101 = scmp.ne.s32.totalorder %s89, %s90
    %p102 = scmp.eq.s32.totalorder %s17, 1
    %p103 = por %p101, %p102
    %p105 = scmp.ne.s32.totalorder %s90, %s104
    %p106 = scmp.eq.s32.totalorder %s17, 0
    %p107 = por %p105, %p106
    %s109 = sadd.s32 %s108, 1
    %p112 = scmp.eq.s32.totalorder %s11, 1
    %p113 = scmp.ne.s32.totalorder %s108, %s110
    %p114 = scmp.eq.s32.totalorder %s11, 0
    %p115 = por %p113, %p114
    %p116 = scmp.ne.s32.totalorder %s108, %s110
    %p117 = scmp.eq.s32.totalorder %s16, 1
    %p118 = por %p116, %p117
    %p119 = scmp.ne.s32.totalorder %s110, %s111
    %p120 = scmp.eq.s32.totalorder %s16, 0
    %p121 = por %p119, %p120
    %p122 = scmp.ne.s32.totalorder %s110, %s111
    %p123 = scmp.eq.s32.totalorder %s17, 1
    %p124 = por %p122, %p123
    %p126 = scmp.ne.s32.totalorder %s111, %s125
    %p127 = scmp.eq.s32.totalorder %s17, 0
    %p128 = por %p126, %p127
    %s129 = ssub.s32 %s11, %s18
    %p130 = scmp.eq.s32.totalorder %s129, 0
    %s132 = sadd.s32 %s131, 1
    %s133 = scalar_select %p130, %s131, %s132
    %p136 = pneg %p130
    %p137 = scmp.eq.s32.totalorder %s11, 1
    %p138 = por %p136, %p137
    %p139 = scmp.ne.s32.totalorder %s131, %s134
    %p140 = scmp.eq.s32.totalorder %s11, 0
    %p141 = por %p139, %p140
    %p142 = scmp.ne.s32.totalorder %s131, %s134
    %p143 = scmp.eq.s32.totalorder %s16, 1
    %p144 = por %p142, %p143
    %p145 = scmp.ne.s32.totalorder %s134, %s135
    %p146 = scmp.eq.s32.totalorder %s16, 0
    %p147 = por %p145, %p146
    %p148 = scmp.ne.s32.totalorder %s134, %s135
    %p149 = scmp.eq.s32.totalorder %s17, 1
    %p150 = por %p148, %p149
    %p152 = scmp.ne.s32.totalorder %s135, %s151
    %p153 = scmp.eq.s32.totalorder %s17, 0
    %p154 = por %p152, %p153
    %p155 = scmp.le.s32.totalorder 1, %s11
    %p156 = scmp.lt.s32.totalorder %s11, 3
    %p157 = pnand %p155, %p156
    %p158 = pneg %p157
    // Predicated region
    $region9: #{down_sample_forward.1} parent=5 // pred_check
      _
    $region10: #{down_sample_forward.1} parent=5 // pred_check_branch
      %160 = sbr.rel (%p157) target = $region12
    $region11: #{down_sample_forward.1} parent=5 // pred_region
      %s161 = ssub.s32 %s11, 1
      // Predicated region
      $region13: #{down_sample_forward.1} parent=11 // pred_check
        %p162 = pneg %p58
      $region14: #{down_sample_forward.1} parent=11 // pred_check_branch
        %164 = sbr.rel (%p162) target = $region16
      $region15: #{down_sample_forward.1} parent=11 // pred_region
        _
      $region16: #{down_sample_forward.1} parent=11 // pred_fallthru
        _
      // Predicated region
      $region17: #{down_sample_forward.1} parent=11 // pred_check
        %p165 = pneg %p79
      $region18: #{down_sample_forward.1} parent=11 // pred_check_branch
        %167 = sbr.rel (%p165) target = $region20
      $region19: #{down_sample_forward.1} parent=11 // pred_region
        _
      $region20: #{down_sample_forward.1} parent=11 // pred_fallthru
        _
      // Predicated region
      $region21: #{down_sample_forward.1} parent=11 // pred_check
        %p168 = pneg %p100
      $region22: #{down_sample_forward.1} parent=11 // pred_check_branch
        %170 = sbr.rel (%p168) target = $region24
      $region23: #{down_sample_forward.1} parent=11 // pred_region
        _
      $region24: #{down_sample_forward.1} parent=11 // pred_fallthru
        _
      // Predicated region
      $region25: #{down_sample_forward.1} parent=11 // pred_check
        %p171 = pneg %p121
      $region26: #{down_sample_forward.1} parent=11 // pred_check_branch
        %173 = sbr.rel (%p171) target = $region28
      $region27: #{down_sample_forward.1} parent=11 // pred_region
        _
      $region28: #{down_sample_forward.1} parent=11 // pred_fallthru
        _
    $region12: #{down_sample_forward.1} parent=5 // pred_fallthru
      _
    %p174 = scmp.lt.s32.totalorder %s11, 2
    // Predicated region
    $region29: #{down_sample_forward.1} parent=5 // pred_check
      %p175 = pneg %p174
    $region30: #{down_sample_forward.1} parent=5 // pred_check_branch
      %177 = sbr.rel (%p175) target = $region32
    $region31: #{down_sample_forward.1} parent=5 // pred_region
      // Predicated region
      $region33: #{down_sample_forward.1} parent=31 // pred_check
        %p178 = pneg %p31
      $region34: #{down_sample_forward.1} parent=31 // pred_check_branch
        %180 = sbr.rel (%p178) target = $region36
      $region35: #{down_sample_forward.1} parent=31 // pred_region
        %p181 = scmp.lt.s32.totalorder %s11, 1
        %s182 = scalar_select %p181, %s11, 1
        %s183 = smul.addr %s182, 128
        %s184 = smul.addr %s183, 2
        %s185 = scalar_lea.vmem %s0, %s184
      $region36: #{down_sample_forward.1} parent=31 // pred_fallthru
        _
    $region32: #{down_sample_forward.1} parent=5 // pred_fallthru
      _
    %p186 = scmp.le.s32.totalorder 1, %s11
    %p187 = scmp.lt.s32.totalorder %s11, 3
    %p188 = pnand %p186, %p187
    %p189 = pneg %p188
    // Predicated region
    $region37: #{down_sample_forward.1} parent=5 // pred_check
      _
    $region38: #{down_sample_forward.1} parent=5 // pred_check_branch
      %191 = sbr.rel (%p188) target = $region40
    $region39: #{down_sample_forward.1} parent=5 // pred_region
      %s192 = ssub.s32 %s11, 1
      %p193 = scmp.lt.s32.totalorder %s16, 1
      %s194 = scalar_select %p193, %s16, 1
      %s195 = smul.addr %s194, 128
      %s196 = smul.addr %s195, 2
      %s197 = scalar_lea.vmem %s0, %s196
      %p198 = pneg %p37
      %p199 = pneg %p34
      %p200 = pneg %p58
      %p201 = pneg %p55
      %p202 = pneg %p79
      %p203 = pneg %p76
      %p204 = pneg %p100
      %p205 = pneg %p97
      %p206 = pneg %p121
      %p207 = pneg %p118
      %p208 = pneg %p147
      %p209 = pneg %p144
      %p210 = scmp.lt.s32.totalorder %s16, 1
      %s211 = scalar_select %p210, %s16, 1
      %s212 = smul.addr %s211, 8
      %s213 = smul.addr %s212, 8
      %s214 = scalar_lea.vmem %s5, %s213
      %p215 = scmp.lt.s32.totalorder %s16, 1
      %s216 = scalar_select %p215, %s16, 1
      %s217 = smul.addr %s216, 128
      %s218 = smul.addr %s217, 2
      %s219 = scalar_lea.vmem %s0, %s218
      %p220 = scmp.lt.s32.totalorder %s16, 1
      %s221 = scalar_select %p220, %s16, 1
      %s222 = smul.addr %s221, 8
      %s223 = smul.addr %s222, 8
      %s224 = scalar_lea.vmem %s5, %s223
      %v226 = vld [vmem:[%s219] sm:$0x3]
      %v227 = vld [vmem:[%s219 + $0x2] sm:$0x3]
      %v228 = vld [vmem:[%s219 + $0x4] sm:$0x3]
      %v229 = vld [vmem:[%s219 + $0x6] sm:$0x3]
      %v230 = vld [vmem:[%s219 + $0x8] sm:$0x3]
      %v231 = vld [vmem:[%s219 + $0xa] sm:$0x3]
      %v232 = vld [vmem:[%s219 + $0xc] sm:$0x3]
      %v233 = vld [vmem:[%s219 + $0xe] sm:$0x3]
      %v234 = vld [vmem:[%s219 + $0x10] sm:$0x3]
      %v235 = vld [vmem:[%s219 + $0x12] sm:$0x3]
      %v236 = vld [vmem:[%s219 + $0x14] sm:$0x3]
      %v237 = vld [vmem:[%s219 + $0x16] sm:$0x3]
      %v238 = vld [vmem:[%s219 + $0x18] sm:$0x3]
      %v239 = vld [vmem:[%s219 + $0x1a] sm:$0x3]
      %v240 = vld [vmem:[%s219 + $0x1c] sm:$0x3]
      %v241 = vld [vmem:[%s219 + $0x1e] sm:$0x3]
      %v242 = vld [vmem:[%s219 + $0x20] sm:$0x3]
      %v243 = vld [vmem:[%s219 + $0x22] sm:$0x3]
      %v244 = vld [vmem:[%s219 + $0x24] sm:$0x3]
      %v245 = vld [vmem:[%s219 + $0x26] sm:$0x3]
      %v246 = vld [vmem:[%s219 + $0x28] sm:$0x3]
      %v247 = vld [vmem:[%s219 + $0x2a] sm:$0x3]
      %v248 = vld [vmem:[%s219 + $0x2c] sm:$0x3]
      %v249 = vld [vmem:[%s219 + $0x2e] sm:$0x3]
      %v250 = vld [vmem:[%s219 + $0x30] sm:$0x3]
      %v251 = vld [vmem:[%s219 + $0x32] sm:$0x3]
      %v252 = vld [vmem:[%s219 + $0x34] sm:$0x3]
      %v253 = vld [vmem:[%s219 + $0x36] sm:$0x3]
      %v254 = vld [vmem:[%s219 + $0x38] sm:$0x3]
      %v255 = vld [vmem:[%s219 + $0x3a] sm:$0x3]
      %v256 = vld [vmem:[%s219 + $0x3c] sm:$0x3]
      %v257 = vld [vmem:[%s219 + $0x3e] sm:$0x3]
      %v258 = vld [vmem:[%s219 + $0x40] sm:$0x3]
      %v259 = vld [vmem:[%s219 + $0x42] sm:$0x3]
      %v260 = vld [vmem:[%s219 + $0x44] sm:$0x3]
      %v261 = vld [vmem:[%s219 + $0x46] sm:$0x3]
      %v262 = vld [vmem:[%s219 + $0x48] sm:$0x3]
      %v263 = vld [vmem:[%s219 + $0x4a] sm:$0x3]
      %v264 = vld [vmem:[%s219 + $0x4c] sm:$0x3]
      %v265 = vld [vmem:[%s219 + $0x4e] sm:$0x3]
      %v266 = vld [vmem:[%s219 + $0x50] sm:$0x3]
      %v267 = vld [vmem:[%s219 + $0x52] sm:$0x3]
      %v268 = vld [vmem:[%s219 + $0x54] sm:$0x3]
      %v269 = vld [vmem:[%s219 + $0x56] sm:$0x3]
      %v270 = vld [vmem:[%s219 + $0x58] sm:$0x3]
      %v271 = vld [vmem:[%s219 + $0x5a] sm:$0x3]
      %v272 = vld [vmem:[%s219 + $0x5c] sm:$0x3]
      %v273 = vld [vmem:[%s219 + $0x5e] sm:$0x3]
      %v274 = vld [vmem:[%s219 + $0x60] sm:$0x3]
      %v275 = vld [vmem:[%s219 + $0x62] sm:$0x3]
      %v276 = vld [vmem:[%s219 + $0x64] sm:$0x3]
      %v277 = vld [vmem:[%s219 + $0x66] sm:$0x3]
      %v278 = vld [vmem:[%s219 + $0x68] sm:$0x3]
      %v279 = vld [vmem:[%s219 + $0x6a] sm:$0x3]
      %v280 = vld [vmem:[%s219 + $0x6c] sm:$0x3]
      %v281 = vld [vmem:[%s219 + $0x6e] sm:$0x3]
      %v282 = vld [vmem:[%s219 + $0x70] sm:$0x3]
      %v283 = vld [vmem:[%s219 + $0x72] sm:$0x3]
      %v284 = vld [vmem:[%s219 + $0x74] sm:$0x3]
      %v285 = vld [vmem:[%s219 + $0x76] sm:$0x3]
      %v286 = vld [vmem:[%s219 + $0x78] sm:$0x3]
      %v287 = vld [vmem:[%s219 + $0x7a] sm:$0x3]
      %v288 = vld [vmem:[%s219 + $0x7c] sm:$0x3]
      %v289 = vld [vmem:[%s219 + $0x7e] sm:$0x3]
      %v290 = vld [vmem:[%s219 + $0x80] sm:$0x3]
      %v291 = vld [vmem:[%s219 + $0x82] sm:$0x3]
      %v292 = vld [vmem:[%s219 + $0x84] sm:$0x3]
      %v293 = vld [vmem:[%s219 + $0x86] sm:$0x3]
      %v294 = vld [vmem:[%s219 + $0x88] sm:$0x3]
      %v295 = vld [vmem:[%s219 + $0x8a] sm:$0x3]
      %v296 = vld [vmem:[%s219 + $0x8c] sm:$0x3]
      %v297 = vld [vmem:[%s219 + $0x8e] sm:$0x3]
      %v298 = vld [vmem:[%s219 + $0x90] sm:$0x3]
      %v299 = vld [vmem:[%s219 + $0x92] sm:$0x3]
      %v300 = vld [vmem:[%s219 + $0x94] sm:$0x3]
      %v301 = vld [vmem:[%s219 + $0x96] sm:$0x3]
      %v302 = vld [vmem:[%s219 + $0x98] sm:$0x3]
      %v303 = vld [vmem:[%s219 + $0x9a] sm:$0x3]
      %v304 = vld [vmem:[%s219 + $0x9c] sm:$0x3]
      %v305 = vld [vmem:[%s219 + $0x9e] sm:$0x3]
      %v306 = vld [vmem:[%s219 + $0xa0] sm:$0x3]
      %v307 = vld [vmem:[%s219 + $0xa2] sm:$0x3]
      %v308 = vld [vmem:[%s219 + $0xa4] sm:$0x3]
      %v309 = vld [vmem:[%s219 + $0xa6] sm:$0x3]
      %v310 = vld [vmem:[%s219 + $0xa8] sm:$0x3]
      %v311 = vld [vmem:[%s219 + $0xaa] sm:$0x3]
      %v312 = vld [vmem:[%s219 + $0xac] sm:$0x3]
      %v313 = vld [vmem:[%s219 + $0xae] sm:$0x3]
      %v314 = vld [vmem:[%s219 + $0xb0] sm:$0x3]
      %v315 = vld [vmem:[%s219 + $0xb2] sm:$0x3]
      %v316 = vld [vmem:[%s219 + $0xb4] sm:$0x3]
      %v317 = vld [vmem:[%s219 + $0xb6] sm:$0x3]
      %v318 = vld [vmem:[%s219 + $0xb8] sm:$0x3]
      %v319 = vld [vmem:[%s219 + $0xba] sm:$0x3]
      %v320 = vld [vmem:[%s219 + $0xbc] sm:$0x3]
      %v321 = vld [vmem:[%s219 + $0xbe] sm:$0x3]
      %v322 = vld [vmem:[%s219 + $0xc0] sm:$0x3]
      %v323 = vld [vmem:[%s219 + $0xc2] sm:$0x3]
      %v324 = vld [vmem:[%s219 + $0xc4] sm:$0x3]
      %v325 = vld [vmem:[%s219 + $0xc6] sm:$0x3]
      %v326 = vld [vmem:[%s219 + $0xc8] sm:$0x3]
      %v327 = vld [vmem:[%s219 + $0xca] sm:$0x3]
      %v328 = vld [vmem:[%s219 + $0xcc] sm:$0x3]
      %v329 = vld [vmem:[%s219 + $0xce] sm:$0x3]
      %v330 = vld [vmem:[%s219 + $0xd0] sm:$0x3]
      %v331 = vld [vmem:[%s219 + $0xd2] sm:$0x3]
      %v332 = vld [vmem:[%s219 + $0xd4] sm:$0x3]
      %v333 = vld [vmem:[%s219 + $0xd6] sm:$0x3]
      %v334 = vld [vmem:[%s219 + $0xd8] sm:$0x3]
      %v335 = vld [vmem:[%s219 + $0xda] sm:$0x3]
      %v336 = vld [vmem:[%s219 + $0xdc] sm:$0x3]
      %v337 = vld [vmem:[%s219 + $0xde] sm:$0x3]
      %v338 = vld [vmem:[%s219 + $0xe0] sm:$0x3]
      %v339 = vld [vmem:[%s219 + $0xe2] sm:$0x3]
      %v340 = vld [vmem:[%s219 + $0xe4] sm:$0x3]
      %v341 = vld [vmem:[%s219 + $0xe6] sm:$0x3]
      %v342 = vld [vmem:[%s219 + $0xe8] sm:$0x3]
      %v343 = vld [vmem:[%s219 + $0xea] sm:$0x3]
      %v344 = vld [vmem:[%s219 + $0xec] sm:$0x3]
      %v345 = vld [vmem:[%s219 + $0xee] sm:$0x3]
      %v346 = vld [vmem:[%s219 + $0xf0] sm:$0x3]
      %v347 = vld [vmem:[%s219 + $0xf2] sm:$0x3]
      %v348 = vld [vmem:[%s219 + $0xf4] sm:$0x3]
      %v349 = vld [vmem:[%s219 + $0xf6] sm:$0x3]
      %v350 = vld [vmem:[%s219 + $0xf8] sm:$0x3]
      %v351 = vld [vmem:[%s219 + $0xfa] sm:$0x3]
      %v352 = vld [vmem:[%s219 + $0xfc] sm:$0x3]
      %v353 = vld [vmem:[%s219 + $0xfe] sm:$0x3]
      %v418 = vrot.slane %v226, 1
      %v419 = vrot.slane %v227, 1
      %v420 = vrot.slane %v228, 1
      %v421 = vrot.slane %v229, 1
      %v422 = vrot.slane %v230, 1
      %v423 = vrot.slane %v231, 1
      %v424 = vrot.slane %v232, 1
      %v425 = vrot.slane %v233, 1
      %v426 = vrot.slane %v242, 1
      %v427 = vrot.slane %v243, 1
      %v428 = vrot.slane %v244, 1
      %v429 = vrot.slane %v245, 1
      %v430 = vrot.slane %v246, 1
      %v431 = vrot.slane %v247, 1
      %v432 = vrot.slane %v248, 1
      %v433 = vrot.slane %v249, 1
      %v434 = vrot.slane %v258, 1
      %v435 = vrot.slane %v259, 1
      %v436 = vrot.slane %v260, 1
      %v437 = vrot.slane %v261, 1
      %v438 = vrot.slane %v262, 1
      %v439 = vrot.slane %v263, 1
      %v440 = vrot.slane %v264, 1
      %v441 = vrot.slane %v265, 1
      %v442 = vrot.slane %v274, 1
      %v443 = vrot.slane %v275, 1
      %v444 = vrot.slane %v276, 1
      %v445 = vrot.slane %v277, 1
      %v446 = vrot.slane %v278, 1
      %v447 = vrot.slane %v279, 1
      %v448 = vrot.slane %v280, 1
      %v449 = vrot.slane %v281, 1
      %v450 = vrot.slane %v290, 1
      %v451 = vrot.slane %v291, 1
      %v452 = vrot.slane %v292, 1
      %v453 = vrot.slane %v293, 1
      %v454 = vrot.slane %v294, 1
      %v455 = vrot.slane %v295, 1
      %v456 = vrot.slane %v296, 1
      %v457 = vrot.slane %v297, 1
      %v458 = vrot.slane %v306, 1
      %v459 = vrot.slane %v307, 1
      %v460 = vrot.slane %v308, 1
      %v461 = vrot.slane %v309, 1
      %v462 = vrot.slane %v310, 1
      %v463 = vrot.slane %v311, 1
      %v464 = vrot.slane %v312, 1
      %v465 = vrot.slane %v313, 1
      %v466 = vrot.slane %v322, 1
      %v467 = vrot.slane %v323, 1
      %v468 = vrot.slane %v324, 1
      %v469 = vrot.slane %v325, 1
      %v470 = vrot.slane %v326, 1
      %v471 = vrot.slane %v327, 1
      %v472 = vrot.slane %v328, 1
      %v473 = vrot.slane %v329, 1
      %v474 = vrot.slane %v338, 1
      %v475 = vrot.slane %v339, 1
      %v476 = vrot.slane %v340, 1
      %v477 = vrot.slane %v341, 1
      %v478 = vrot.slane %v342, 1
      %v479 = vrot.slane %v343, 1
      %v480 = vrot.slane %v344, 1
      %v481 = vrot.slane %v345, 1
      %v546 = vmax.f32 %v226, %v418
      %v547 = vmax.f32 %v227, %v419
      %v548 = vmax.f32 %v228, %v420
      %v549 = vmax.f32 %v229, %v421
      %v550 = vmax.f32 %v230, %v422
      %v551 = vmax.f32 %v231, %v423
      %v552 = vmax.f32 %v232, %v424
      %v553 = vmax.f32 %v233, %v425
      %v554 = vmax.f32 %v242, %v426
      %v555 = vmax.f32 %v243, %v427
      %v556 = vmax.f32 %v244, %v428
      %v557 = vmax.f32 %v245, %v429
      %v558 = vmax.f32 %v246, %v430
      %v559 = vmax.f32 %v247, %v431
      %v560 = vmax.f32 %v248, %v432
      %v561 = vmax.f32 %v249, %v433
      %v562 = vmax.f32 %v258, %v434
      %v563 = vmax.f32 %v259, %v435
      %v564 = vmax.f32 %v260, %v436
      %v565 = vmax.f32 %v261, %v437
      %v566 = vmax.f32 %v262, %v438
      %v567 = vmax.f32 %v263, %v439
      %v568 = vmax.f32 %v264, %v440
      %v569 = vmax.f32 %v265, %v441
      %v570 = vmax.f32 %v274, %v442
      %v571 = vmax.f32 %v275, %v443
      %v572 = vmax.f32 %v276, %v444
      %v573 = vmax.f32 %v277, %v445
      %v574 = vmax.f32 %v278, %v446
      %v575 = vmax.f32 %v279, %v447
      %v576 = vmax.f32 %v280, %v448
      %v577 = vmax.f32 %v281, %v449
      %v578 = vmax.f32 %v290, %v450
      %v579 = vmax.f32 %v291, %v451
      %v580 = vmax.f32 %v292, %v452
      %v581 = vmax.f32 %v293, %v453
      %v582 = vmax.f32 %v294, %v454
      %v583 = vmax.f32 %v295, %v455
      %v584 = vmax.f32 %v296, %v456
      %v585 = vmax.f32 %v297, %v457
      %v586 = vmax.f32 %v306, %v458
      %v587 = vmax.f32 %v307, %v459
      %v588 = vmax.f32 %v308, %v460
      %v589 = vmax.f32 %v309, %v461
      %v590 = vmax.f32 %v310, %v462
      %v591 = vmax.f32 %v311, %v463
      %v592 = vmax.f32 %v312, %v464
      %v593 = vmax.f32 %v313, %v465
      %v594 = vmax.f32 %v322, %v466
      %v595 = vmax.f32 %v323, %v467
      %v596 = vmax.f32 %v324, %v468
      %v597 = vmax.f32 %v325, %v469
      %v598 = vmax.f32 %v326, %v470
      %v599 = vmax.f32 %v327, %v471
      %v600 = vmax.f32 %v328, %v472
      %v601 = vmax.f32 %v329, %v473
      %v602 = vmax.f32 %v338, %v474
      %v603 = vmax.f32 %v339, %v475
      %v604 = vmax.f32 %v340, %v476
      %v605 = vmax.f32 %v341, %v477
      %v606 = vmax.f32 %v342, %v478
      %v607 = vmax.f32 %v343, %v479
      %v608 = vmax.f32 %v344, %v480
      %v609 = vmax.f32 %v345, %v481
      %v674 = vrot.slane %v234, 1
      %v675 = vrot.slane %v235, 1
      %v676 = vrot.slane %v236, 1
      %v677 = vrot.slane %v237, 1
      %v678 = vrot.slane %v238, 1
      %v679 = vrot.slane %v239, 1
      %v680 = vrot.slane %v240, 1
      %v681 = vrot.slane %v241, 1
      %v682 = vrot.slane %v250, 1
      %v683 = vrot.slane %v251, 1
      %v684 = vrot.slane %v252, 1
      %v685 = vrot.slane %v253, 1
      %v686 = vrot.slane %v254, 1
      %v687 = vrot.slane %v255, 1
      %v688 = vrot.slane %v256, 1
      %v689 = vrot.slane %v257, 1
      %v690 = vrot.slane %v266, 1
      %v691 = vrot.slane %v267, 1
      %v692 = vrot.slane %v268, 1
      %v693 = vrot.slane %v269, 1
      %v694 = vrot.slane %v270, 1
      %v695 = vrot.slane %v271, 1
      %v696 = vrot.slane %v272, 1
      %v697 = vrot.slane %v273, 1
      %v698 = vrot.slane %v282, 1
      %v699 = vrot.slane %v283, 1
      %v700 = vrot.slane %v284, 1
      %v701 = vrot.slane %v285, 1
      %v702 = vrot.slane %v286, 1
      %v703 = vrot.slane %v287, 1
      %v704 = vrot.slane %v288, 1
      %v705 = vrot.slane %v289, 1
      %v706 = vrot.slane %v298, 1
      %v707 = vrot.slane %v299, 1
      %v708 = vrot.slane %v300, 1
      %v709 = vrot.slane %v301, 1
      %v710 = vrot.slane %v302, 1
      %v711 = vrot.slane %v303, 1
      %v712 = vrot.slane %v304, 1
      %v713 = vrot.slane %v305, 1
      %v714 = vrot.slane %v314, 1
      %v715 = vrot.slane %v315, 1
      %v716 = vrot.slane %v316, 1
      %v717 = vrot.slane %v317, 1
      %v718 = vrot.slane %v318, 1
      %v719 = vrot.slane %v319, 1
      %v720 = vrot.slane %v320, 1
      %v721 = vrot.slane %v321, 1
      %v722 = vrot.slane %v330, 1
      %v723 = vrot.slane %v331, 1
      %v724 = vrot.slane %v332, 1
      %v725 = vrot.slane %v333, 1
      %v726 = vrot.slane %v334, 1
      %v727 = vrot.slane %v335, 1
      %v728 = vrot.slane %v336, 1
      %v729 = vrot.slane %v337, 1
      %v730 = vrot.slane %v346, 1
      %v731 = vrot.slane %v347, 1
      %v732 = vrot.slane %v348, 1
      %v733 = vrot.slane %v349, 1
      %v734 = vrot.slane %v350, 1
      %v735 = vrot.slane %v351, 1
      %v736 = vrot.slane %v352, 1
      %v737 = vrot.slane %v353, 1
      %v802 = vmax.f32 %v234, %v674
      %v803 = vmax.f32 %v235, %v675
      %v804 = vmax.f32 %v236, %v676
      %v805 = vmax.f32 %v237, %v677
      %v806 = vmax.f32 %v238, %v678
      %v807 = vmax.f32 %v239, %v679
      %v808 = vmax.f32 %v240, %v680
      %v809 = vmax.f32 %v241, %v681
      %v810 = vmax.f32 %v250, %v682
      %v811 = vmax.f32 %v251, %v683
      %v812 = vmax.f32 %v252, %v684
      %v813 = vmax.f32 %v253, %v685
      %v814 = vmax.f32 %v254, %v686
      %v815 = vmax.f32 %v255, %v687
      %v816 = vmax.f32 %v256, %v688
      %v817 = vmax.f32 %v257, %v689
      %v818 = vmax.f32 %v266, %v690
      %v819 = vmax.f32 %v267, %v691
      %v820 = vmax.f32 %v268, %v692
      %v821 = vmax.f32 %v269, %v693
      %v822 = vmax.f32 %v270, %v694
      %v823 = vmax.f32 %v271, %v695
      %v824 = vmax.f32 %v272, %v696
      %v825 = vmax.f32 %v273, %v697
      %v826 = vmax.f32 %v282, %v698
      %v827 = vmax.f32 %v283, %v699
      %v828 = vmax.f32 %v284, %v700
      %v829 = vmax.f32 %v285, %v701
      %v830 = vmax.f32 %v286, %v702
      %v831 = vmax.f32 %v287, %v703
      %v832 = vmax.f32 %v288, %v704
      %v833 = vmax.f32 %v289, %v705
      %v834 = vmax.f32 %v298, %v706
      %v835 = vmax.f32 %v299, %v707
      %v836 = vmax.f32 %v300, %v708
      %v837 = vmax.f32 %v301, %v709
      %v838 = vmax.f32 %v302, %v710
      %v839 = vmax.f32 %v303, %v711
      %v840 = vmax.f32 %v304, %v712
      %v841 = vmax.f32 %v305, %v713
      %v842 = vmax.f32 %v314, %v714
      %v843 = vmax.f32 %v315, %v715
      %v844 = vmax.f32 %v316, %v716
      %v845 = vmax.f32 %v317, %v717
      %v846 = vmax.f32 %v318, %v718
      %v847 = vmax.f32 %v319, %v719
      %v848 = vmax.f32 %v320, %v720
      %v849 = vmax.f32 %v321, %v721
      %v850 = vmax.f32 %v330, %v722
      %v851 = vmax.f32 %v331, %v723
      %v852 = vmax.f32 %v332, %v724
      %v853 = vmax.f32 %v333, %v725
      %v854 = vmax.f32 %v334, %v726
      %v855 = vmax.f32 %v335, %v727
      %v856 = vmax.f32 %v336, %v728
      %v857 = vmax.f32 %v337, %v729
      %v858 = vmax.f32 %v346, %v730
      %v859 = vmax.f32 %v347, %v731
      %v860 = vmax.f32 %v348, %v732
      %v861 = vmax.f32 %v349, %v733
      %v862 = vmax.f32 %v350, %v734
      %v863 = vmax.f32 %v351, %v735
      %v864 = vmax.f32 %v352, %v736
      %v865 = vmax.f32 %v353, %v737
      %v866 = vmax.f32 %v546, %v802
      %v867 = vmax.f32 %v547, %v803
      %v868 = vmax.f32 %v548, %v804
      %v869 = vmax.f32 %v549, %v805
      %v870 = vmax.f32 %v550, %v806
      %v871 = vmax.f32 %v551, %v807
      %v872 = vmax.f32 %v552, %v808
      %v873 = vmax.f32 %v553, %v809
      %v874 = vmax.f32 %v554, %v810
      %v875 = vmax.f32 %v555, %v811
      %v876 = vmax.f32 %v556, %v812
      %v877 = vmax.f32 %v557, %v813
      %v878 = vmax.f32 %v558, %v814
      %v879 = vmax.f32 %v559, %v815
      %v880 = vmax.f32 %v560, %v816
      %v881 = vmax.f32 %v561, %v817
      %v882 = vmax.f32 %v562, %v818
      %v883 = vmax.f32 %v563, %v819
      %v884 = vmax.f32 %v564, %v820
      %v885 = vmax.f32 %v565, %v821
      %v886 = vmax.f32 %v566, %v822
      %v887 = vmax.f32 %v567, %v823
      %v888 = vmax.f32 %v568, %v824
      %v889 = vmax.f32 %v569, %v825
      %v890 = vmax.f32 %v570, %v826
      %v891 = vmax.f32 %v571, %v827
      %v892 = vmax.f32 %v572, %v828
      %v893 = vmax.f32 %v573, %v829
      %v894 = vmax.f32 %v574, %v830
      %v895 = vmax.f32 %v575, %v831
      %v896 = vmax.f32 %v576, %v832
      %v897 = vmax.f32 %v577, %v833
      %v898 = vmax.f32 %v578, %v834
      %v899 = vmax.f32 %v579, %v835
      %v900 = vmax.f32 %v580, %v836
      %v901 = vmax.f32 %v581, %v837
      %v902 = vmax.f32 %v582, %v838
      %v903 = vmax.f32 %v583, %v839
      %v904 = vmax.f32 %v584, %v840
      %v905 = vmax.f32 %v585, %v841
      %v906 = vmax.f32 %v586, %v842
      %v907 = vmax.f32 %v587, %v843
      %v908 = vmax.f32 %v588, %v844
      %v909 = vmax.f32 %v589, %v845
      %v910 = vmax.f32 %v590, %v846
      %v911 = vmax.f32 %v591, %v847
      %v912 = vmax.f32 %v592, %v848
      %v913 = vmax.f32 %v593, %v849
      %v914 = vmax.f32 %v594, %v850
      %v915 = vmax.f32 %v595, %v851
      %v916 = vmax.f32 %v596, %v852
      %v917 = vmax.f32 %v597, %v853
      %v918 = vmax.f32 %v598, %v854
      %v919 = vmax.f32 %v599, %v855
      %v920 = vmax.f32 %v600, %v856
      %v921 = vmax.f32 %v601, %v857
      %v922 = vmax.f32 %v602, %v858
      %v923 = vmax.f32 %v603, %v859
      %v924 = vmax.f32 %v604, %v860
      %v925 = vmax.f32 %v605, %v861
      %v926 = vmax.f32 %v606, %v862
      %v927 = vmax.f32 %v607, %v863
      %v928 = vmax.f32 %v608, %v864
      %v929 = vmax.f32 %v609, %v865
      %vm930 = vcmask 31744
      %931 = vst.msk [vmem:[#allocation2] sm:$0xff] %vm930, 0.0
      %vm932 = vcmask 25600
      %933 = vst.msk [vmem:[#allocation2 + $0x8] sm:$0x3] %vm932, 0.0
      %s934 = scalar_lea.vmem [#allocation2], 144
      %935 = vst.msk [vmem:[%s934] sm:$0xff] %vm930, 0.0
      %936 = vst.msk [vmem:[%s934 + $0x8] sm:$0x3] %vm932, 0.0
      %vm937 = vcmask 24576
      %938 = vst.msk [vmem:[#allocation2] sm:$0x1] %vm937, 0.0
      %939 = vst.msk [vmem:[#allocation2 + $0x10] sm:$0x1] %vm937, 0.0
      %940 = vst.msk [vmem:[#allocation2 + $0x20] sm:$0x1] %vm937, 0.0
      %941 = vst.msk [vmem:[#allocation2 + $0x30] sm:$0x1] %vm937, 0.0
      %942 = vst.msk [vmem:[#allocation2 + $0x40] sm:$0x1] %vm937, 0.0
      %943 = vst.msk [vmem:[#allocation2 + $0x50] sm:$0x1] %vm937, 0.0
      %944 = vst.msk [vmem:[#allocation2 + $0x60] sm:$0x1] %vm937, 0.0
      %945 = vst.msk [vmem:[#allocation2 + $0x70] sm:$0x1] %vm937, 0.0
      %946 = vst.msk [vmem:[#allocation2 + $0x80] sm:$0x1] %vm937, 0.0
      %947 = vst.msk [vmem:[#allocation2 + $0x90] sm:$0x1] %vm937, 0.0
      %948 = vst.msk [vmem:[#allocation2 + $0x9] sm:$0x1] %vm937, 0.0
      %949 = vst.msk [vmem:[#allocation2 + $0x19] sm:$0x1] %vm937, 0.0
      %950 = vst.msk [vmem:[#allocation2 + $0x29] sm:$0x1] %vm937, 0.0
      %951 = vst.msk [vmem:[#allocation2 + $0x39] sm:$0x1] %vm937, 0.0
      %952 = vst.msk [vmem:[#allocation2 + $0x49] sm:$0x1] %vm937, 0.0
      %953 = vst.msk [vmem:[#allocation2 + $0x59] sm:$0x1] %vm937, 0.0
      %954 = vst.msk [vmem:[#allocation2 + $0x69] sm:$0x1] %vm937, 0.0
      %955 = vst.msk [vmem:[#allocation2 + $0x79] sm:$0x1] %vm937, 0.0
      %956 = vst.msk [vmem:[#allocation2 + $0x89] sm:$0x1] %vm937, 0.0
      %957 = vst.msk [vmem:[#allocation2 + $0x99] sm:$0x1] %vm937, 0.0
      %v1022 = vrot.slane %v867, 7
      %vm1023 = vcmask 1041409
      %v1024 = vsel %vm1023, %v1022, %v866
      %v1025 = vrot.slane %v868, 6
      %vm1026 = vcmask 1042434
      %v1027 = vsel %vm1026, %v1025, %v1024
      %v1028 = vrot.slane %v869, 5
      %vm1029 = vcmask 1043459
      %v1030 = vsel %vm1029, %v1028, %v1027
      %v1031 = vrot.slane %v870, 4
      %vm1032 = vcmask 1044484
      %v1033 = vsel %vm1032, %v1031, %v1030
      %v1034 = vrot.slane %v871, 3
      %vm1035 = vcmask 1045509
      %v1036 = vsel %vm1035, %v1034, %v1033
      %v1037 = vrot.slane %v872, 2
      %vm1038 = vcmask 1046534
      %v1039 = vsel %vm1038, %v1037, %v1036
      %v1040 = vrot.slane %v873, 1
      %vm1041 = vcmask 1047559
      %v1042 = vsel %vm1041, %v1040, %v1039
      %v1043 = vrot.slane %v875, 7
      %v1044 = vsel %vm1023, %v1043, %v874
      %v1045 = vrot.slane %v876, 6
      %v1046 = vsel %vm1026, %v1045, %v1044
      %v1047 = vrot.slane %v877, 5
      %v1048 = vsel %vm1029, %v1047, %v1046
      %v1049 = vrot.slane %v878, 4
      %v1050 = vsel %vm1032, %v1049, %v1048
      %v1051 = vrot.slane %v879, 3
      %v1052 = vsel %vm1035, %v1051, %v1050
      %v1053 = vrot.slane %v880, 2
      %v1054 = vsel %vm1038, %v1053, %v1052
      %v1055 = vrot.slane %v881, 1
      %v1056 = vsel %vm1041, %v1055, %v1054
      %v1057 = vrot.slane %v883, 7
      %v1058 = vsel %vm1023, %v1057, %v882
      %v1059 = vrot.slane %v884, 6
      %v1060 = vsel %vm1026, %v1059, %v1058
      %v1061 = vrot.slane %v885, 5
      %v1062 = vsel %vm1029, %v1061, %v1060
      %v1063 = vrot.slane %v886, 4
      %v1064 = vsel %vm1032, %v1063, %v1062
      %v1065 = vrot.slane %v887, 3
      %v1066 = vsel %vm1035, %v1065, %v1064
      %v1067 = vrot.slane %v888, 2
      %v1068 = vsel %vm1038, %v1067, %v1066
      %v1069 = vrot.slane %v889, 1
      %v1070 = vsel %vm1041, %v1069, %v1068
      %v1071 = vrot.slane %v891, 7
      %v1072 = vsel %vm1023, %v1071, %v890
      %v1073 = vrot.slane %v892, 6
      %v1074 = vsel %vm1026, %v1073, %v1072
      %v1075 = vrot.slane %v893, 5
      %v1076 = vsel %vm1029, %v1075, %v1074
      %v1077 = vrot.slane %v894, 4
      %v1078 = vsel %vm1032, %v1077, %v1076
      %v1079 = vrot.slane %v895, 3
      %v1080 = vsel %vm1035, %v1079, %v1078
      %v1081 = vrot.slane %v896, 2
      %v1082 = vsel %vm1038, %v1081, %v1080
      %v1083 = vrot.slane %v897, 1
      %v1084 = vsel %vm1041, %v1083, %v1082
      %v1085 = vrot.slane %v899, 7
      %v1086 = vsel %vm1023, %v1085, %v898
      %v1087 = vrot.slane %v900, 6
      %v1088 = vsel %vm1026, %v1087, %v1086
      %v1089 = vrot.slane %v901, 5
      %v1090 = vsel %vm1029, %v1089, %v1088
      %v1091 = vrot.slane %v902, 4
      %v1092 = vsel %vm1032, %v1091, %v1090
      %v1093 = vrot.slane %v903, 3
      %v1094 = vsel %vm1035, %v1093, %v1092
      %v1095 = vrot.slane %v904, 2
      %v1096 = vsel %vm1038, %v1095, %v1094
      %v1097 = vrot.slane %v905, 1
      %v1098 = vsel %vm1041, %v1097, %v1096
      %v1099 = vrot.slane %v907, 7
      %v1100 = vsel %vm1023, %v1099, %v906
      %v1101 = vrot.slane %v908, 6
      %v1102 = vsel %vm1026, %v1101, %v1100
      %v1103 = vrot.slane %v909, 5
      %v1104 = vsel %vm1029, %v1103, %v1102
      %v1105 = vrot.slane %v910, 4
      %v1106 = vsel %vm1032, %v1105, %v1104
      %v1107 = vrot.slane %v911, 3
      %v1108 = vsel %vm1035, %v1107, %v1106
      %v1109 = vrot.slane %v912, 2
      %v1110 = vsel %vm1038, %v1109, %v1108
      %v1111 = vrot.slane %v913, 1
      %v1112 = vsel %vm1041, %v1111, %v1110
      %v1113 = vrot.slane %v915, 7
      %v1114 = vsel %vm1023, %v1113, %v914
      %v1115 = vrot.slane %v916, 6
      %v1116 = vsel %vm1026, %v1115, %v1114
      %v1117 = vrot.slane %v917, 5
      %v1118 = vsel %vm1029, %v1117, %v1116
      %v1119 = vrot.slane %v918, 4
      %v1120 = vsel %vm1032, %v1119, %v1118
      %v1121 = vrot.slane %v919, 3
      %v1122 = vsel %vm1035, %v1121, %v1120
      %v1123 = vrot.slane %v920, 2
      %v1124 = vsel %vm1038, %v1123, %v1122
      %v1125 = vrot.slane %v921, 1
      %v1126 = vsel %vm1041, %v1125, %v1124
      %v1127 = vrot.slane %v923, 7
      %v1128 = vsel %vm1023, %v1127, %v922
      %v1129 = vrot.slane %v924, 6
      %v1130 = vsel %vm1026, %v1129, %v1128
      %v1131 = vrot.slane %v925, 5
      %v1132 = vsel %vm1029, %v1131, %v1130
      %v1133 = vrot.slane %v926, 4
      %v1134 = vsel %vm1032, %v1133, %v1132
      %v1135 = vrot.slane %v927, 3
      %v1136 = vsel %vm1035, %v1135, %v1134
      %v1137 = vrot.slane %v928, 2
      %v1138 = vsel %vm1038, %v1137, %v1136
      %v1139 = vrot.slane %v929, 1
      %v1140 = vsel %vm1041, %v1139, %v1138
      %s1149 = scalar_lea.vmem [#allocation2], 16
      %1150 = vst.msk [vmem:[%s1149 + $0x1] sm:$0xff] %vm930, %v1042
      %1151 = vst.msk [vmem:[%s1149 + $0x11] sm:$0xff] %vm930, %v1056
      %1152 = vst.msk [vmem:[%s1149 + $0x21] sm:$0xff] %vm930, %v1070
      %1153 = vst.msk [vmem:[%s1149 + $0x31] sm:$0xff] %vm930, %v1084
      %1154 = vst.msk [vmem:[%s1149 + $0x41] sm:$0xff] %vm930, %v1098
      %1155 = vst.msk [vmem:[%s1149 + $0x51] sm:$0xff] %vm930, %v1112
      %1156 = vst.msk [vmem:[%s1149 + $0x61] sm:$0xff] %vm930, %v1126
      %1157 = vst.msk [vmem:[%s1149 + $0x71] sm:$0xff] %vm930, %v1140
      %v1158 = vld [vmem:[#allocation2] sm:$0xff]
      %v1159 = vld [vmem:[#allocation2 + $0x8] sm:$0x3]
      %v1160 = vld [vmem:[#allocation2 + $0x10] sm:$0xff]
      %v1161 = vld [vmem:[#allocation2 + $0x18] sm:$0x3]
      %v1162 = vld [vmem:[#allocation2 + $0x20] sm:$0xff]
      %v1163 = vld [vmem:[#allocation2 + $0x28] sm:$0x3]
      %v1164 = vld [vmem:[#allocation2 + $0x30] sm:$0xff]
      %v1165 = vld [vmem:[#allocation2 + $0x38] sm:$0x3]
      %v1166 = vld [vmem:[#allocation2 + $0x40] sm:$0xff]
      %v1167 = vld [vmem:[#allocation2 + $0x48] sm:$0x3]
      %v1168 = vld [vmem:[#allocation2 + $0x50] sm:$0xff]
      %v1169 = vld [vmem:[#allocation2 + $0x58] sm:$0x3]
      %v1170 = vld [vmem:[#allocation2 + $0x60] sm:$0xff]
      %v1171 = vld [vmem:[#allocation2 + $0x68] sm:$0x3]
      %v1172 = vld [vmem:[#allocation2 + $0x70] sm:$0xff]
      %v1173 = vld [vmem:[#allocation2 + $0x78] sm:$0x3]
      %v1174 = vld [vmem:[#allocation2 + $0x80] sm:$0xff]
      %v1175 = vld [vmem:[#allocation2 + $0x88] sm:$0x3]
      %v1176 = vld [vmem:[#allocation2 + $0x90] sm:$0xff]
      %v1177 = vld [vmem:[#allocation2 + $0x98] sm:$0x3]
      %v1178 = vpack.c.bf16 %v1160, %v1158
      %v1179 = vpack.c.bf16 %v1164, %v1162
      %v1180 = vpack.c.bf16 %v1168, %v1166
      %v1181 = vpack.c.bf16 %v1172, %v1170
      %v1182 = vld [vmem:[%s1] sm:$0x3]
      %vm1199 = vcmask 1046528
      %v1200 = vrot.slane %v1158, 1
      %v1201 = vrot.slane %v1159, 1
      %v1202 = vsel %vm1199, %v1200, %v1201
      %v1203 = vrot.slane %v1160, 1
      %v1204 = vrot.slane %v1161, 1
      %v1205 = vsel %vm1199, %v1203, %v1204
      %v1206 = vrot.slane %v1162, 1
      %v1207 = vrot.slane %v1163, 1
      %v1208 = vsel %vm1199, %v1206, %v1207
      %v1209 = vrot.slane %v1164, 1
      %v1210 = vrot.slane %v1165, 1
      %v1211 = vsel %vm1199, %v1209, %v1210
      %v1212 = vrot.slane %v1166, 1
      %v1213 = vrot.slane %v1167, 1
      %v1214 = vsel %vm1199, %v1212, %v1213
      %v1215 = vrot.slane %v1168, 1
      %v1216 = vrot.slane %v1169, 1
      %v1217 = vsel %vm1199, %v1215, %v1216
      %v1218 = vrot.slane %v1170, 1
      %v1219 = vrot.slane %v1171, 1
      %v1220 = vsel %vm1199, %v1218, %v1219
      %v1221 = vrot.slane %v1172, 1
      %v1222 = vrot.slane %v1173, 1
      %v1223 = vsel %vm1199, %v1221, %v1222
      %v1232 = vpack.c.bf16 %v1205, %v1202
      %v1233 = vpack.c.bf16 %v1211, %v1208
      %v1234 = vpack.c.bf16 %v1217, %v1214
      %v1235 = vpack.c.bf16 %v1223, %v1220
      %s1236 = scalar_lea.vmem %s1, 2
      %v1237 = vld [vmem:[%s1236] sm:$0x3]
      %v1239 = vsel %vm930, %v1232, 0
      %v1242 = vsel %vm930, %v1233, 0
      %v1245 = vsel %vm930, %v1234, 0
      %v1248 = vsel %vm930, %v1235, 0
      %vm1250 = vcmask 1041408
      %v1252 = vsel %vm1250, %v1237, 0
      %1254 = vmatpush.bf16.msra.mxu0 0
      %1255 = vmatpush.bf16.msra.mxu0 0
      %1256 = vmatpush.bf16.msra.mxu0 0
      %1257 = vmatpush.bf16.msra.mxu0 0
      %1258 = vmatpush.bf16.msra.mxu0 0
      %1259 = vmatpush.bf16.msra.mxu0 0
      %1260 = vmatpush.bf16.msra.mxu0 0
      %1261 = vmatpush.bf16.msra.mxu0 %v1252
      %1262 = vmatmul.bf16.gmra.mxu0 %v1239
      %v1263 = vpop.f32.mrf.mxu0
      %v1264 = vadd.f32 0.0, %v1263
      %v1265 = vpop.f32.mrf.mxu0
      %v1266 = vadd.f32 0.0, %v1265
      %1267 = vmatmul.bf16.gmra.mxu0 %v1242
      %v1268 = vpop.f32.mrf.mxu0
      %v1269 = vadd.f32 0.0, %v1268
      %v1270 = vpop.f32.mrf.mxu0
      %v1271 = vadd.f32 0.0, %v1270
      %1272 = vmatmul.bf16.gmra.mxu0 %v1245
      %v1273 = vpop.f32.mrf.mxu0
      %v1274 = vadd.f32 0.0, %v1273
      %v1275 = vpop.f32.mrf.mxu0
      %v1276 = vadd.f32 0.0, %v1275
      %1277 = vmatmul.bf16.gmra.mxu0 %v1248
      %v1278 = vpop.f32.mrf.mxu0
      %v1279 = vadd.f32 0.0, %v1278
      %v1280 = vpop.f32.mrf.mxu0
      %v1281 = vadd.f32 0.0, %v1280
      %1282 = vdwg.mxu0
      %v1284 = vsel %vm930, %v1178, 0
      %v1287 = vsel %vm930, %v1179, 0
      %v1290 = vsel %vm930, %v1180, 0
      %v1293 = vsel %vm930, %v1181, 0
      %v1296 = vsel %vm1250, %v1182, 0
      %1298 = vmatpush.bf16.msra.mxu0 0
      %1299 = vmatpush.bf16.msra.mxu0 0
      %1300 = vmatpush.bf16.msra.mxu0 0
      %1301 = vmatpush.bf16.msra.mxu0 0
      %1302 = vmatpush.bf16.msra.mxu0 0
      %1303 = vmatpush.bf16.msra.mxu0 0
      %1304 = vmatpush.bf16.msra.mxu0 0
      %1305 = vmatpush.bf16.msra.mxu0 %v1296
      %1306 = vmatmul.bf16.gmra.mxu0 %v1284
      %v1307 = vpop.f32.mrf.mxu0
      %v1308 = vadd.f32 %v1264, %v1307
      %v1309 = vpop.f32.mrf.mxu0
      %v1310 = vadd.f32 %v1266, %v1309
      %1311 = vmatmul.bf16.gmra.mxu0 %v1287
      %v1312 = vpop.f32.mrf.mxu0
      %v1313 = vadd.f32 %v1269, %v1312
      %v1314 = vpop.f32.mrf.mxu0
      %v1315 = vadd.f32 %v1271, %v1314
      %1316 = vmatmul.bf16.gmra.mxu0 %v1290
      %v1317 = vpop.f32.mrf.mxu0
      %v1318 = vadd.f32 %v1274, %v1317
      %v1319 = vpop.f32.mrf.mxu0
      %v1320 = vadd.f32 %v1276, %v1319
      %1321 = vmatmul.bf16.gmra.mxu0 %v1293
      %v1322 = vpop.f32.mrf.mxu0
      %v1323 = vadd.f32 %v1279, %v1322
      %v1324 = vpop.f32.mrf.mxu0
      %v1325 = vadd.f32 %v1281, %v1324
      %1326 = vdwg.mxu0
      %vm1327 = vcmask 1045504
      %v1328 = vrot.slane %v1158, 2
      %v1329 = vrot.slane %v1159, 2
      %v1330 = vsel %vm1327, %v1328, %v1329
      %v1331 = vrot.slane %v1160, 2
      %v1332 = vrot.slane %v1161, 2
      %v1333 = vsel %vm1327, %v1331, %v1332
      %v1334 = vrot.slane %v1162, 2
      %v1335 = vrot.slane %v1163, 2
      %v1336 = vsel %vm1327, %v1334, %v1335
      %v1337 = vrot.slane %v1164, 2
      %v1338 = vrot.slane %v1165, 2
      %v1339 = vsel %vm1327, %v1337, %v1338
      %v1340 = vrot.slane %v1166, 2
      %v1341 = vrot.slane %v1167, 2
      %v1342 = vsel %vm1327, %v1340, %v1341
      %v1343 = vrot.slane %v1168, 2
      %v1344 = vrot.slane %v1169, 2
      %v1345 = vsel %vm1327, %v1343, %v1344
      %v1346 = vrot.slane %v1170, 2
      %v1347 = vrot.slane %v1171, 2
      %v1348 = vsel %vm1327, %v1346, %v1347
      %v1349 = vrot.slane %v1172, 2
      %v1350 = vrot.slane %v1173, 2
      %v1351 = vsel %vm1327, %v1349, %v1350
      %v1360 = vpack.c.bf16 %v1333, %v1330
      %v1361 = vpack.c.bf16 %v1339, %v1336
      %v1362 = vpack.c.bf16 %v1345, %v1342
      %v1363 = vpack.c.bf16 %v1351, %v1348
      %s1364 = scalar_lea.vmem %s1, 4
      %v1365 = vld [vmem:[%s1364] sm:$0x3]
      %v1367 = vsel %vm930, %v1360, 0
      %v1370 = vsel %vm930, %v1361, 0
      %v1373 = vsel %vm930, %v1362, 0
      %v1376 = vsel %vm930, %v1363, 0
      %v1379 = vsel %vm1250, %v1365, 0
      %1381 = vmatpush.bf16.msra.mxu0 0
      %1382 = vmatpush.bf16.msra.mxu0 0
      %1383 = vmatpush.bf16.msra.mxu0 0
      %1384 = vmatpush.bf16.msra.mxu0 0
      %1385 = vmatpush.bf16.msra.mxu0 0
      %1386 = vmatpush.bf16.msra.mxu0 0
      %1387 = vmatpush.bf16.msra.mxu0 0
      %1388 = vmatpush.bf16.msra.mxu0 %v1379
      %1389 = vmatmul.bf16.gmra.mxu0 %v1367
      %v1390 = vpop.f32.mrf.mxu0
      %v1391 = vadd.f32 0.0, %v1390
      %v1392 = vpop.f32.mrf.mxu0
      %v1393 = vadd.f32 0.0, %v1392
      %1394 = vmatmul.bf16.gmra.mxu0 %v1370
      %v1395 = vpop.f32.mrf.mxu0
      %v1396 = vadd.f32 0.0, %v1395
      %v1397 = vpop.f32.mrf.mxu0
      %v1398 = vadd.f32 0.0, %v1397
      %1399 = vmatmul.bf16.gmra.mxu0 %v1373
      %v1400 = vpop.f32.mrf.mxu0
      %v1401 = vadd.f32 0.0, %v1400
      %v1402 = vpop.f32.mrf.mxu0
      %v1403 = vadd.f32 0.0, %v1402
      %1404 = vmatmul.bf16.gmra.mxu0 %v1376
      %v1405 = vpop.f32.mrf.mxu0
      %v1406 = vadd.f32 0.0, %v1405
      %v1407 = vpop.f32.mrf.mxu0
      %v1408 = vadd.f32 0.0, %v1407
      %1409 = vdwg.mxu0
      %v1410 = vadd.f32 %v1308, %v1391
      %v1411 = vadd.f32 %v1310, %v1393
      %v1412 = vadd.f32 %v1313, %v1396
      %v1413 = vadd.f32 %v1315, %v1398
      %v1414 = vadd.f32 %v1318, %v1401
      %v1415 = vadd.f32 %v1320, %v1403
      %v1416 = vadd.f32 %v1323, %v1406
      %v1417 = vadd.f32 %v1325, %v1408
      %v1418 = vpack.c.bf16 %v1162, %v1160
      %v1419 = vpack.c.bf16 %v1166, %v1164
      %v1420 = vpack.c.bf16 %v1170, %v1168
      %v1421 = vpack.c.bf16 %v1174, %v1172
      %s1422 = scalar_lea.vmem %s1, 6
      %v1423 = vld [vmem:[%s1422] sm:$0x3]
      %v1425 = vsel %vm930, %v1418, 0
      %v1428 = vsel %vm930, %v1419, 0
      %v1431 = vsel %vm930, %v1420, 0
      %v1434 = vsel %vm930, %v1421, 0
      %v1437 = vsel %vm1250, %v1423, 0
      %1439 = vmatpush.bf16.msra.mxu0 0
      %1440 = vmatpush.bf16.msra.mxu0 0
      %1441 = vmatpush.bf16.msra.mxu0 0
      %1442 = vmatpush.bf16.msra.mxu0 0
      %1443 = vmatpush.bf16.msra.mxu0 0
      %1444 = vmatpush.bf16.msra.mxu0 0
      %1445 = vmatpush.bf16.msra.mxu0 0
      %1446 = vmatpush.bf16.msra.mxu0 %v1437
      %1447 = vmatmul.bf16.gmra.mxu0 %v1425
      %v1448 = vpop.f32.mrf.mxu0
      %v1449 = vadd.f32 0.0, %v1448
      %v1450 = vpop.f32.mrf.mxu0
      %v1451 = vadd.f32 0.0, %v1450
      %1452 = vmatmul.bf16.gmra.mxu0 %v1428
      %v1453 = vpop.f32.mrf.mxu0
      %v1454 = vadd.f32 0.0, %v1453
      %v1455 = vpop.f32.mrf.mxu0
      %v1456 = vadd.f32 0.0, %v1455
      %1457 = vmatmul.bf16.gmra.mxu0 %v1431
      %v1458 = vpop.f32.mrf.mxu0
      %v1459 = vadd.f32 0.0, %v1458
      %v1460 = vpop.f32.mrf.mxu0
      %v1461 = vadd.f32 0.0, %v1460
      %1462 = vmatmul.bf16.gmra.mxu0 %v1434
      %v1463 = vpop.f32.mrf.mxu0
      %v1464 = vadd.f32 0.0, %v1463
      %v1465 = vpop.f32.mrf.mxu0
      %v1466 = vadd.f32 0.0, %v1465
      %1467 = vdwg.mxu0
      %v1468 = vadd.f32 %v1410, %v1449
      %v1469 = vadd.f32 %v1411, %v1451
      %v1470 = vadd.f32 %v1412, %v1454
      %v1471 = vadd.f32 %v1413, %v1456
      %v1472 = vadd.f32 %v1414, %v1459
      %v1473 = vadd.f32 %v1415, %v1461
      %v1474 = vadd.f32 %v1416, %v1464
      %v1475 = vadd.f32 %v1417, %v1466
      %v1478 = vrot.slane %v1174, 1
      %v1479 = vrot.slane %v1175, 1
      %v1480 = vsel %vm1199, %v1478, %v1479
      %v1482 = vpack.c.bf16 %v1208, %v1205
      %v1483 = vpack.c.bf16 %v1214, %v1211
      %v1484 = vpack.c.bf16 %v1220, %v1217
      %v1485 = vpack.c.bf16 %v1480, %v1223
      %s1486 = scalar_lea.vmem %s1, 8
      %v1487 = vld [vmem:[%s1486] sm:$0x3]
      %v1489 = vsel %vm930, %v1482, 0
      %v1492 = vsel %vm930, %v1483, 0
      %v1495 = vsel %vm930, %v1484, 0
      %v1498 = vsel %vm930, %v1485, 0
      %v1501 = vsel %vm1250, %v1487, 0
      %1503 = vmatpush.bf16.msra.mxu0 0
      %1504 = vmatpush.bf16.msra.mxu0 0
      %1505 = vmatpush.bf16.msra.mxu0 0
      %1506 = vmatpush.bf16.msra.mxu0 0
      %1507 = vmatpush.bf16.msra.mxu0 0
      %1508 = vmatpush.bf16.msra.mxu0 0
      %1509 = vmatpush.bf16.msra.mxu0 0
      %1510 = vmatpush.bf16.msra.mxu0 %v1501
      %1511 = vmatmul.bf16.gmra.mxu0 %v1489
      %v1512 = vpop.f32.mrf.mxu0
      %v1513 = vadd.f32 0.0, %v1512
      %v1514 = vpop.f32.mrf.mxu0
      %v1515 = vadd.f32 0.0, %v1514
      %1516 = vmatmul.bf16.gmra.mxu0 %v1492
      %v1517 = vpop.f32.mrf.mxu0
      %v1518 = vadd.f32 0.0, %v1517
      %v1519 = vpop.f32.mrf.mxu0
      %v1520 = vadd.f32 0.0, %v1519
      %1521 = vmatmul.bf16.gmra.mxu0 %v1495
      %v1522 = vpop.f32.mrf.mxu0
      %v1523 = vadd.f32 0.0, %v1522
      %v1524 = vpop.f32.mrf.mxu0
      %v1525 = vadd.f32 0.0, %v1524
      %1526 = vmatmul.bf16.gmra.mxu0 %v1498
      %v1527 = vpop.f32.mrf.mxu0
      %v1528 = vadd.f32 0.0, %v1527
      %v1529 = vpop.f32.mrf.mxu0
      %v1530 = vadd.f32 0.0, %v1529
      %1531 = vdwg.mxu0
      %v1532 = vadd.f32 %v1468, %v1513
      %v1533 = vadd.f32 %v1469, %v1515
      %v1534 = vadd.f32 %v1470, %v1518
      %v1535 = vadd.f32 %v1471, %v1520
      %v1536 = vadd.f32 %v1472, %v1523
      %v1537 = vadd.f32 %v1473, %v1525
      %v1538 = vadd.f32 %v1474, %v1528
      %v1539 = vadd.f32 %v1475, %v1530
      %v1540 = vrot.slane %v1174, 2
      %v1541 = vrot.slane %v1175, 2
      %v1542 = vsel %vm1327, %v1540, %v1541
      %v1544 = vpack.c.bf16 %v1336, %v1333
      %v1545 = vpack.c.bf16 %v1342, %v1339
      %v1546 = vpack.c.bf16 %v1348, %v1345
      %v1547 = vpack.c.bf16 %v1542, %v1351
      %s1548 = scalar_lea.vmem %s1, 10
      %v1549 = vld [vmem:[%s1548] sm:$0x3]
      %v1551 = vsel %vm930, %v1544, 0
      %v1554 = vsel %vm930, %v1545, 0
      %v1557 = vsel %vm930, %v1546, 0
      %v1560 = vsel %vm930, %v1547, 0
      %v1563 = vsel %vm1250, %v1549, 0
      %1565 = vmatpush.bf16.msra.mxu0 0
      %1566 = vmatpush.bf16.msra.mxu0 0
      %1567 = vmatpush.bf16.msra.mxu0 0
      %1568 = vmatpush.bf16.msra.mxu0 0
      %1569 = vmatpush.bf16.msra.mxu0 0
      %1570 = vmatpush.bf16.msra.mxu0 0
      %1571 = vmatpush.bf16.msra.mxu0 0
      %1572 = vmatpush.bf16.msra.mxu0 %v1563
      %1573 = vmatmul.bf16.gmra.mxu0 %v1551
      %v1574 = vpop.f32.mrf.mxu0
      %v1575 = vadd.f32 0.0, %v1574
      %v1576 = vpop.f32.mrf.mxu0
      %v1577 = vadd.f32 0.0, %v1576
      %1578 = vmatmul.bf16.gmra.mxu0 %v1554
      %v1579 = vpop.f32.mrf.mxu0
      %v1580 = vadd.f32 0.0, %v1579
      %v1581 = vpop.f32.mrf.mxu0
      %v1582 = vadd.f32 0.0, %v1581
      %1583 = vmatmul.bf16.gmra.mxu0 %v1557
      %v1584 = vpop.f32.mrf.mxu0
      %v1585 = vadd.f32 0.0, %v1584
      %v1586 = vpop.f32.mrf.mxu0
      %v1587 = vadd.f32 0.0, %v1586
      %1588 = vmatmul.bf16.gmra.mxu0 %v1560
      %v1589 = vpop.f32.mrf.mxu0
      %v1590 = vadd.f32 0.0, %v1589
      %v1591 = vpop.f32.mrf.mxu0
      %v1592 = vadd.f32 0.0, %v1591
      %1593 = vdwg.mxu0
      %v1594 = vadd.f32 %v1532, %v1575
      %v1595 = vadd.f32 %v1533, %v1577
      %v1596 = vadd.f32 %v1534, %v1580
      %v1597 = vadd.f32 %v1535, %v1582
      %v1598 = vadd.f32 %v1536, %v1585
      %v1599 = vadd.f32 %v1537, %v1587
      %v1600 = vadd.f32 %v1538, %v1590
      %v1601 = vadd.f32 %v1539, %v1592
      %v1602 = vpack.c.bf16 %v1176, %v1174
      %s1603 = scalar_lea.vmem %s1, 12
      %v1604 = vld [vmem:[%s1603] sm:$0x3]
      %v1606 = vsel %vm930, %v1602, 0
      %v1609 = vsel %vm1250, %v1604, 0
      %1611 = vmatpush.bf16.msra.mxu0 0
      %1612 = vmatpush.bf16.msra.mxu0 0
      %1613 = vmatpush.bf16.msra.mxu0 0
      %1614 = vmatpush.bf16.msra.mxu0 0
      %1615 = vmatpush.bf16.msra.mxu0 0
      %1616 = vmatpush.bf16.msra.mxu0 0
      %1617 = vmatpush.bf16.msra.mxu0 0
      %1618 = vmatpush.bf16.msra.mxu0 %v1609
      %1619 = vmatmul.bf16.gmra.mxu0 %v1287
      %v1620 = vpop.f32.mrf.mxu0
      %v1621 = vadd.f32 0.0, %v1620
      %v1622 = vpop.f32.mrf.mxu0
      %v1623 = vadd.f32 0.0, %v1622
      %1624 = vmatmul.bf16.gmra.mxu0 %v1290
      %v1625 = vpop.f32.mrf.mxu0
      %v1626 = vadd.f32 0.0, %v1625
      %v1627 = vpop.f32.mrf.mxu0
      %v1628 = vadd.f32 0.0, %v1627
      %1629 = vmatmul.bf16.gmra.mxu0 %v1293
      %v1630 = vpop.f32.mrf.mxu0
      %v1631 = vadd.f32 0.0, %v1630
      %v1632 = vpop.f32.mrf.mxu0
      %v1633 = vadd.f32 0.0, %v1632
      %1634 = vmatmul.bf16.gmra.mxu0 %v1606
      %v1635 = vpop.f32.mrf.mxu0
      %v1636 = vadd.f32 0.0, %v1635
      %v1637 = vpop.f32.mrf.mxu0
      %v1638 = vadd.f32 0.0, %v1637
      %1639 = vdwg.mxu0
      %v1640 = vadd.f32 %v1594, %v1621
      %v1641 = vadd.f32 %v1595, %v1623
      %v1642 = vadd.f32 %v1596, %v1626
      %v1643 = vadd.f32 %v1597, %v1628
      %v1644 = vadd.f32 %v1598, %v1631
      %v1645 = vadd.f32 %v1599, %v1633
      %v1646 = vadd.f32 %v1600, %v1636
      %v1647 = vadd.f32 %v1601, %v1638
      %v1650 = vrot.slane %v1176, 1
      %v1651 = vrot.slane %v1177, 1
      %v1652 = vsel %vm1199, %v1650, %v1651
      %v1654 = vpack.c.bf16 %v1652, %v1480
      %s1655 = scalar_lea.vmem %s1, 14
      %v1656 = vld [vmem:[%s1655] sm:$0x3]
      %v1658 = vsel %vm930, %v1654, 0
      %v1661 = vsel %vm1250, %v1656, 0
      %1663 = vmatpush.bf16.msra.mxu0 0
      %1664 = vmatpush.bf16.msra.mxu0 0
      %1665 = vmatpush.bf16.msra.mxu0 0
      %1666 = vmatpush.bf16.msra.mxu0 0
      %1667 = vmatpush.bf16.msra.mxu0 0
      %1668 = vmatpush.bf16.msra.mxu0 0
      %1669 = vmatpush.bf16.msra.mxu0 0
      %1670 = vmatpush.bf16.msra.mxu0 %v1661
      %1671 = vmatmul.bf16.gmra.mxu0 %v1242
      %v1672 = vpop.f32.mrf.mxu0
      %v1673 = vadd.f32 0.0, %v1672
      %v1674 = vpop.f32.mrf.mxu0
      %v1675 = vadd.f32 0.0, %v1674
      %1676 = vmatmul.bf16.gmra.mxu0 %v1245
      %v1677 = vpop.f32.mrf.mxu0
      %v1678 = vadd.f32 0.0, %v1677
      %v1679 = vpop.f32.mrf.mxu0
      %v1680 = vadd.f32 0.0, %v1679
      %1681 = vmatmul.bf16.gmra.mxu0 %v1248
      %v1682 = vpop.f32.mrf.mxu0
      %v1683 = vadd.f32 0.0, %v1682
      %v1684 = vpop.f32.mrf.mxu0
      %v1685 = vadd.f32 0.0, %v1684
      %1686 = vmatmul.bf16.gmra.mxu0 %v1658
      %v1687 = vpop.f32.mrf.mxu0
      %v1688 = vadd.f32 0.0, %v1687
      %v1689 = vpop.f32.mrf.mxu0
      %v1690 = vadd.f32 0.0, %v1689
      %1691 = vdwg.mxu0
      %v1692 = vadd.f32 %v1640, %v1673
      %v1693 = vadd.f32 %v1641, %v1675
      %v1694 = vadd.f32 %v1642, %v1678
      %v1695 = vadd.f32 %v1643, %v1680
      %v1696 = vadd.f32 %v1644, %v1683
      %v1697 = vadd.f32 %v1645, %v1685
      %v1698 = vadd.f32 %v1646, %v1688
      %v1699 = vadd.f32 %v1647, %v1690
      %v1700 = vrot.slane %v1176, 2
      %v1701 = vrot.slane %v1177, 2
      %v1702 = vsel %vm1327, %v1700, %v1701
      %v1704 = vpack.c.bf16 %v1702, %v1542
      %s1705 = scalar_lea.vmem %s1, 16
      %v1706 = vld [vmem:[%s1705] sm:$0x3]
      %v1708 = vsel %vm930, %v1704, 0
      %v1711 = vsel %vm1250, %v1706, 0
      %1713 = vmatpush.bf16.msra.mxu0 0
      %1714 = vmatpush.bf16.msra.mxu0 0
      %1715 = vmatpush.bf16.msra.mxu0 0
      %1716 = vmatpush.bf16.msra.mxu0 0
      %1717 = vmatpush.bf16.msra.mxu0 0
      %1718 = vmatpush.bf16.msra.mxu0 0
      %1719 = vmatpush.bf16.msra.mxu0 0
      %1720 = vmatpush.bf16.msra.mxu0 %v1711
      %1721 = vmatmul.bf16.gmra.mxu0 %v1370
      %v1722 = vpop.f32.mrf.mxu0
      %v1723 = vadd.f32 0.0, %v1722
      %v1724 = vpop.f32.mrf.mxu0
      %v1725 = vadd.f32 0.0, %v1724
      %1726 = vmatmul.bf16.gmra.mxu0 %v1373
      %v1727 = vpop.f32.mrf.mxu0
      %v1728 = vadd.f32 0.0, %v1727
      %v1729 = vpop.f32.mrf.mxu0
      %v1730 = vadd.f32 0.0, %v1729
      %1731 = vmatmul.bf16.gmra.mxu0 %v1376
      %v1732 = vpop.f32.mrf.mxu0
      %v1733 = vadd.f32 0.0, %v1732
      %v1734 = vpop.f32.mrf.mxu0
      %v1735 = vadd.f32 0.0, %v1734
      %1736 = vmatmul.bf16.gmra.mxu0 %v1708
      %v1737 = vpop.f32.mrf.mxu0
      %v1738 = vadd.f32 0.0, %v1737
      %v1739 = vpop.f32.mrf.mxu0
      %v1740 = vadd.f32 0.0, %v1739
      %1741 = vdwg.mxu0
      %v1742 = vadd.f32 %v1692, %v1723
      %v1743 = vadd.f32 %v1693, %v1725
      %v1744 = vadd.f32 %v1694, %v1728
      %v1745 = vadd.f32 %v1695, %v1730
      %v1746 = vadd.f32 %v1696, %v1733
      %v1747 = vadd.f32 %v1697, %v1735
      %v1748 = vadd.f32 %v1698, %v1738
      %v1749 = vadd.f32 %v1699, %v1740
      %v1750 = vld [vmem:[%s2] sm:$0x1]
      %v1752 = vperm.slane %v1750, 0
      %v1754 = vadd.f32 %v1742, %v1752
      %v1755 = vadd.f32 %v1743, %v1752
      %v1756 = vadd.f32 %v1744, %v1752
      %v1757 = vadd.f32 %v1745, %v1752
      %v1758 = vadd.f32 %v1746, %v1752
      %v1759 = vadd.f32 %v1747, %v1752
      %v1760 = vadd.f32 %v1748, %v1752
      %v1761 = vadd.f32 %v1749, %v1752
      %v1762 = vmax.f32 %v1754, 0.0
      %v1763 = vmax.f32 %v1755, 0.0
      %v1764 = vmax.f32 %v1756, 0.0
      %v1765 = vmax.f32 %v1757, 0.0
      %v1766 = vmax.f32 %v1758, 0.0
      %v1767 = vmax.f32 %v1759, 0.0
      %v1768 = vmax.f32 %v1760, 0.0
      %v1769 = vmax.f32 %v1761, 0.0
      %vm1770 = vcmask 64512
      %1771 = vst.msk [vmem:[#allocation3] sm:$0xff] %vm1770, 0.0
      %vm1772 = vcmask 58368
      %1773 = vst.msk [vmem:[#allocation3 + $0x8] sm:$0x3] %vm1772, 0.0
      %s1774 = scalar_lea.vmem [#allocation3], 144
      %1775 = vst.msk [vmem:[%s1774] sm:$0xff] %vm1770, 0.0
      %1776 = vst.msk [vmem:[%s1774 + $0x8] sm:$0x3] %vm1772, 0.0
      %vm1777 = vcmask 57344
      %1778 = vst.msk [vmem:[#allocation3] sm:$0x1] %vm1777, 0.0
      %1779 = vst.msk [vmem:[#allocation3 + $0x10] sm:$0x1] %vm1777, 0.0
      %1780 = vst.msk [vmem:[#allocation3 + $0x20] sm:$0x1] %vm1777, 0.0
      %1781 = vst.msk [vmem:[#allocation3 + $0x30] sm:$0x1] %vm1777, 0.0
      %1782 = vst.msk [vmem:[#allocation3 + $0x40] sm:$0x1] %vm1777, 0.0
      %1783 = vst.msk [vmem:[#allocation3 + $0x50] sm:$0x1] %vm1777, 0.0
      %1784 = vst.msk [vmem:[#allocation3 + $0x60] sm:$0x1] %vm1777, 0.0
      %1785 = vst.msk [vmem:[#allocation3 + $0x70] sm:$0x1] %vm1777, 0.0
      %1786 = vst.msk [vmem:[#allocation3 + $0x80] sm:$0x1] %vm1777, 0.0
      %1787 = vst.msk [vmem:[#allocation3 + $0x90] sm:$0x1] %vm1777, 0.0
      %1788 = vst.msk [vmem:[#allocation3 + $0x9] sm:$0x1] %vm1777, 0.0
      %1789 = vst.msk [vmem:[#allocation3 + $0x19] sm:$0x1] %vm1777, 0.0
      %1790 = vst.msk [vmem:[#allocation3 + $0x29] sm:$0x1] %vm1777, 0.0
      %1791 = vst.msk [vmem:[#allocation3 + $0x39] sm:$0x1] %vm1777, 0.0
      %1792 = vst.msk [vmem:[#allocation3 + $0x49] sm:$0x1] %vm1777, 0.0
      %1793 = vst.msk [vmem:[#allocation3 + $0x59] sm:$0x1] %vm1777, 0.0
      %1794 = vst.msk [vmem:[#allocation3 + $0x69] sm:$0x1] %vm1777, 0.0
      %1795 = vst.msk [vmem:[#allocation3 + $0x79] sm:$0x1] %vm1777, 0.0
      %1796 = vst.msk [vmem:[#allocation3 + $0x89] sm:$0x1] %vm1777, 0.0
      %1797 = vst.msk [vmem:[#allocation3 + $0x99] sm:$0x1] %vm1777, 0.0
      %s1798 = scalar_lea.vmem [#allocation3], 16
      %1799 = vst.msk [vmem:[%s1798 + $0x1] sm:$0xff] %vm1770, %v1762
      %1800 = vst.msk [vmem:[%s1798 + $0x11] sm:$0xff] %vm1770, %v1763
      %1801 = vst.msk [vmem:[%s1798 + $0x21] sm:$0xff] %vm1770, %v1764
      %1802 = vst.msk [vmem:[%s1798 + $0x31] sm:$0xff] %vm1770, %v1765
      %1803 = vst.msk [vmem:[%s1798 + $0x41] sm:$0xff] %vm1770, %v1766
      %1804 = vst.msk [vmem:[%s1798 + $0x51] sm:$0xff] %vm1770, %v1767
      %1805 = vst.msk [vmem:[%s1798 + $0x61] sm:$0xff] %vm1770, %v1768
      %1806 = vst.msk [vmem:[%s1798 + $0x71] sm:$0xff] %vm1770, %v1769
      %v1807 = vld [vmem:[#allocation3] sm:$0xff]
      %v1808 = vld [vmem:[#allocation3 + $0x8] sm:$0x3]
      %v1809 = vld [vmem:[#allocation3 + $0x10] sm:$0xff]
      %v1810 = vld [vmem:[#allocation3 + $0x18] sm:$0x3]
      %v1811 = vld [vmem:[#allocation3 + $0x20] sm:$0xff]
      %v1812 = vld [vmem:[#allocation3 + $0x28] sm:$0x3]
      %v1813 = vld [vmem:[#allocation3 + $0x30] sm:$0xff]
      %v1814 = vld [vmem:[#allocation3 + $0x38] sm:$0x3]
      %v1815 = vld [vmem:[#allocation3 + $0x40] sm:$0xff]
      %v1816 = vld [vmem:[#allocation3 + $0x48] sm:$0x3]
      %v1817 = vld [vmem:[#allocation3 + $0x50] sm:$0xff]
      %v1818 = vld [vmem:[#allocation3 + $0x58] sm:$0x3]
      %v1819 = vld [vmem:[#allocation3 + $0x60] sm:$0xff]
      %v1820 = vld [vmem:[#allocation3 + $0x68] sm:$0x3]
      %v1821 = vld [vmem:[#allocation3 + $0x70] sm:$0xff]
      %v1822 = vld [vmem:[#allocation3 + $0x78] sm:$0x3]
      %v1823 = vld [vmem:[#allocation3 + $0x80] sm:$0xff]
      %v1824 = vld [vmem:[#allocation3 + $0x88] sm:$0x3]
      %v1825 = vld [vmem:[#allocation3 + $0x90] sm:$0xff]
      %v1826 = vld [vmem:[#allocation3 + $0x98] sm:$0x3]
      %v1827 = vpack.c.bf16 %v1809, %v1807
      %v1828 = vpack.c.bf16 %v1813, %v1811
      %v1829 = vpack.c.bf16 %v1817, %v1815
      %v1830 = vpack.c.bf16 %v1821, %v1819
      %v1831 = vld [vmem:[%s3] sm:$0xf]
      %v1848 = vrot.slane %v1807, 1
      %v1849 = vrot.slane %v1808, 1
      %v1850 = vsel %vm1199, %v1848, %v1849
      %v1851 = vrot.slane %v1809, 1
      %v1852 = vrot.slane %v1810, 1
      %v1853 = vsel %vm1199, %v1851, %v1852
      %v1854 = vrot.slane %v1811, 1
      %v1855 = vrot.slane %v1812, 1
      %v1856 = vsel %vm1199, %v1854, %v1855
      %v1857 = vrot.slane %v1813, 1
      %v1858 = vrot.slane %v1814, 1
      %v1859 = vsel %vm1199, %v1857, %v1858
      %v1860 = vrot.slane %v1815, 1
      %v1861 = vrot.slane %v1816, 1
      %v1862 = vsel %vm1199, %v1860, %v1861
      %v1863 = vrot.slane %v1817, 1
      %v1864 = vrot.slane %v1818, 1
      %v1865 = vsel %vm1199, %v1863, %v1864
      %v1866 = vrot.slane %v1819, 1
      %v1867 = vrot.slane %v1820, 1
      %v1868 = vsel %vm1199, %v1866, %v1867
      %v1869 = vrot.slane %v1821, 1
      %v1870 = vrot.slane %v1822, 1
      %v1871 = vsel %vm1199, %v1869, %v1870
      %v1880 = vpack.c.bf16 %v1853, %v1850
      %v1881 = vpack.c.bf16 %v1859, %v1856
      %v1882 = vpack.c.bf16 %v1865, %v1862
      %v1883 = vpack.c.bf16 %v1871, %v1868
      %s1884 = scalar_lea.vmem %s3, 4
      %v1885 = vld [vmem:[%s1884] sm:$0xf]
      %v1887 = vsel %vm1770, %v1880, 0
      %v1890 = vsel %vm1770, %v1881, 0
      %v1893 = vsel %vm1770, %v1882, 0
      %v1896 = vsel %vm1770, %v1883, 0
      %vm1898 = vcmask 1043456
      %v1900 = vsel %vm1898, %v1885, 0
      %1902 = vmatpush.bf16.msra.mxu0 0
      %1903 = vmatpush.bf16.msra.mxu0 0
      %1904 = vmatpush.bf16.msra.mxu0 0
      %1905 = vmatpush.bf16.msra.mxu0 0
      %1906 = vmatpush.bf16.msra.mxu0 0
      %1907 = vmatpush.bf16.msra.mxu0 0
      %1908 = vmatpush.bf16.msra.mxu0 0
      %1909 = vmatpush.bf16.msra.mxu0 %v1900
      %1910 = vmatmul.bf16.gmra.mxu0 %v1887
      %v1911 = vpop.f32.mrf.mxu0
      %v1912 = vadd.f32 0.0, %v1911
      %v1913 = vpop.f32.mrf.mxu0
      %v1914 = vadd.f32 0.0, %v1913
      %1915 = vmatmul.bf16.gmra.mxu0 %v1890
      %v1916 = vpop.f32.mrf.mxu0
      %v1917 = vadd.f32 0.0, %v1916
      %v1918 = vpop.f32.mrf.mxu0
      %v1919 = vadd.f32 0.0, %v1918
      %1920 = vmatmul.bf16.gmra.mxu0 %v1893
      %v1921 = vpop.f32.mrf.mxu0
      %v1922 = vadd.f32 0.0, %v1921
      %v1923 = vpop.f32.mrf.mxu0
      %v1924 = vadd.f32 0.0, %v1923
      %1925 = vmatmul.bf16.gmra.mxu0 %v1896
      %v1926 = vpop.f32.mrf.mxu0
      %v1927 = vadd.f32 0.0, %v1926
      %v1928 = vpop.f32.mrf.mxu0
      %v1929 = vadd.f32 0.0, %v1928
      %1930 = vdwg.mxu0
      %v1932 = vsel %vm1770, %v1827, 0
      %v1935 = vsel %vm1770, %v1828, 0
      %v1938 = vsel %vm1770, %v1829, 0
      %v1941 = vsel %vm1770, %v1830, 0
      %v1944 = vsel %vm1898, %v1831, 0
      %1946 = vmatpush.bf16.msra.mxu0 0
      %1947 = vmatpush.bf16.msra.mxu0 0
      %1948 = vmatpush.bf16.msra.mxu0 0
      %1949 = vmatpush.bf16.msra.mxu0 0
      %1950 = vmatpush.bf16.msra.mxu0 0
      %1951 = vmatpush.bf16.msra.mxu0 0
      %1952 = vmatpush.bf16.msra.mxu0 0
      %1953 = vmatpush.bf16.msra.mxu0 %v1944
      %1954 = vmatmul.bf16.gmra.mxu0 %v1932
      %v1955 = vpop.f32.mrf.mxu0
      %v1956 = vadd.f32 %v1912, %v1955
      %v1957 = vpop.f32.mrf.mxu0
      %v1958 = vadd.f32 %v1914, %v1957
      %1959 = vmatmul.bf16.gmra.mxu0 %v1935
      %v1960 = vpop.f32.mrf.mxu0
      %v1961 = vadd.f32 %v1917, %v1960
      %v1962 = vpop.f32.mrf.mxu0
      %v1963 = vadd.f32 %v1919, %v1962
      %1964 = vmatmul.bf16.gmra.mxu0 %v1938
      %v1965 = vpop.f32.mrf.mxu0
      %v1966 = vadd.f32 %v1922, %v1965
      %v1967 = vpop.f32.mrf.mxu0
      %v1968 = vadd.f32 %v1924, %v1967
      %1969 = vmatmul.bf16.gmra.mxu0 %v1941
      %v1970 = vpop.f32.mrf.mxu0
      %v1971 = vadd.f32 %v1927, %v1970
      %v1972 = vpop.f32.mrf.mxu0
      %v1973 = vadd.f32 %v1929, %v1972
      %1974 = vdwg.mxu0
      %v1975 = vrot.slane %v1807, 2
      %v1976 = vrot.slane %v1808, 2
      %v1977 = vsel %vm1327, %v1975, %v1976
      %v1978 = vrot.slane %v1809, 2
      %v1979 = vrot.slane %v1810, 2
      %v1980 = vsel %vm1327, %v1978, %v1979
      %v1981 = vrot.slane %v1811, 2
      %v1982 = vrot.slane %v1812, 2
      %v1983 = vsel %vm1327, %v1981, %v1982
      %v1984 = vrot.slane %v1813, 2
      %v1985 = vrot.slane %v1814, 2
      %v1986 = vsel %vm1327, %v1984, %v1985
      %v1987 = vrot.slane %v1815, 2
      %v1988 = vrot.slane %v1816, 2
      %v1989 = vsel %vm1327, %v1987, %v1988
      %v1990 = vrot.slane %v1817, 2
      %v1991 = vrot.slane %v1818, 2
      %v1992 = vsel %vm1327, %v1990, %v1991
      %v1993 = vrot.slane %v1819, 2
      %v1994 = vrot.slane %v1820, 2
      %v1995 = vsel %vm1327, %v1993, %v1994
      %v1996 = vrot.slane %v1821, 2
      %v1997 = vrot.slane %v1822, 2
      %v1998 = vsel %vm1327, %v1996, %v1997
      %v2007 = vpack.c.bf16 %v1980, %v1977
      %v2008 = vpack.c.bf16 %v1986, %v1983
      %v2009 = vpack.c.bf16 %v1992, %v1989
      %v2010 = vpack.c.bf16 %v1998, %v1995
      %s2011 = scalar_lea.vmem %s3, 8
      %v2012 = vld [vmem:[%s2011] sm:$0xf]
      %v2014 = vsel %vm1770, %v2007, 0
      %v2017 = vsel %vm1770, %v2008, 0
      %v2020 = vsel %vm1770, %v2009, 0
      %v2023 = vsel %vm1770, %v2010, 0
      %v2026 = vsel %vm1898, %v2012, 0
      %2028 = vmatpush.bf16.msra.mxu0 0
      %2029 = vmatpush.bf16.msra.mxu0 0
      %2030 = vmatpush.bf16.msra.mxu0 0
      %2031 = vmatpush.bf16.msra.mxu0 0
      %2032 = vmatpush.bf16.msra.mxu0 0
      %2033 = vmatpush.bf16.msra.mxu0 0
      %2034 = vmatpush.bf16.msra.mxu0 0
      %2035 = vmatpush.bf16.msra.mxu0 %v2026
      %2036 = vmatmul.bf16.gmra.mxu0 %v2014
      %v2037 = vpop.f32.mrf.mxu0
      %v2038 = vadd.f32 0.0, %v2037
      %v2039 = vpop.f32.mrf.mxu0
      %v2040 = vadd.f32 0.0, %v2039
      %2041 = vmatmul.bf16.gmra.mxu0 %v2017
      %v2042 = vpop.f32.mrf.mxu0
      %v2043 = vadd.f32 0.0, %v2042
      %v2044 = vpop.f32.mrf.mxu0
      %v2045 = vadd.f32 0.0, %v2044
      %2046 = vmatmul.bf16.gmra.mxu0 %v2020
      %v2047 = vpop.f32.mrf.mxu0
      %v2048 = vadd.f32 0.0, %v2047
      %v2049 = vpop.f32.mrf.mxu0
      %v2050 = vadd.f32 0.0, %v2049
      %2051 = vmatmul.bf16.gmra.mxu0 %v2023
      %v2052 = vpop.f32.mrf.mxu0
      %v2053 = vadd.f32 0.0, %v2052
      %v2054 = vpop.f32.mrf.mxu0
      %v2055 = vadd.f32 0.0, %v2054
      %2056 = vdwg.mxu0
      %v2057 = vadd.f32 %v1956, %v2038
      %v2058 = vadd.f32 %v1958, %v2040
      %v2059 = vadd.f32 %v1961, %v2043
      %v2060 = vadd.f32 %v1963, %v2045
      %v2061 = vadd.f32 %v1966, %v2048
      %v2062 = vadd.f32 %v1968, %v2050
      %v2063 = vadd.f32 %v1971, %v2053
      %v2064 = vadd.f32 %v1973, %v2055
      %v2065 = vpack.c.bf16 %v1811, %v1809
      %v2066 = vpack.c.bf16 %v1815, %v1813
      %v2067 = vpack.c.bf16 %v1819, %v1817
      %v2068 = vpack.c.bf16 %v1823, %v1821
      %s2069 = scalar_lea.vmem %s3, 12
      %v2070 = vld [vmem:[%s2069] sm:$0xf]
      %v2072 = vsel %vm1770, %v2065, 0
      %v2075 = vsel %vm1770, %v2066, 0
      %v2078 = vsel %vm1770, %v2067, 0
      %v2081 = vsel %vm1770, %v2068, 0
      %v2084 = vsel %vm1898, %v2070, 0
      %2086 = vmatpush.bf16.msra.mxu0 0
      %2087 = vmatpush.bf16.msra.mxu0 0
      %2088 = vmatpush.bf16.msra.mxu0 0
      %2089 = vmatpush.bf16.msra.mxu0 0
      %2090 = vmatpush.bf16.msra.mxu0 0
      %2091 = vmatpush.bf16.msra.mxu0 0
      %2092 = vmatpush.bf16.msra.mxu0 0
      %2093 = vmatpush.bf16.msra.mxu0 %v2084
      %2094 = vmatmul.bf16.gmra.mxu0 %v2072
      %v2095 = vpop.f32.mrf.mxu0
      %v2096 = vadd.f32 0.0, %v2095
      %v2097 = vpop.f32.mrf.mxu0
      %v2098 = vadd.f32 0.0, %v2097
      %2099 = vmatmul.bf16.gmra.mxu0 %v2075
      %v2100 = vpop.f32.mrf.mxu0
      %v2101 = vadd.f32 0.0, %v2100
      %v2102 = vpop.f32.mrf.mxu0
      %v2103 = vadd.f32 0.0, %v2102
      %2104 = vmatmul.bf16.gmra.mxu0 %v2078
      %v2105 = vpop.f32.mrf.mxu0
      %v2106 = vadd.f32 0.0, %v2105
      %v2107 = vpop.f32.mrf.mxu0
      %v2108 = vadd.f32 0.0, %v2107
      %2109 = vmatmul.bf16.gmra.mxu0 %v2081
      %v2110 = vpop.f32.mrf.mxu0
      %v2111 = vadd.f32 0.0, %v2110
      %v2112 = vpop.f32.mrf.mxu0
      %v2113 = vadd.f32 0.0, %v2112
      %2114 = vdwg.mxu0
      %v2115 = vadd.f32 %v2057, %v2096
      %v2116 = vadd.f32 %v2058, %v2098
      %v2117 = vadd.f32 %v2059, %v2101
      %v2118 = vadd.f32 %v2060, %v2103
      %v2119 = vadd.f32 %v2061, %v2106
      %v2120 = vadd.f32 %v2062, %v2108
      %v2121 = vadd.f32 %v2063, %v2111
      %v2122 = vadd.f32 %v2064, %v2113
      %v2125 = vrot.slane %v1823, 1
      %v2126 = vrot.slane %v1824, 1
      %v2127 = vsel %vm1199, %v2125, %v2126
      %v2129 = vpack.c.bf16 %v1856, %v1853
      %v2130 = vpack.c.bf16 %v1862, %v1859
      %v2131 = vpack.c.bf16 %v1868, %v1865
      %v2132 = vpack.c.bf16 %v2127, %v1871
      %s2133 = scalar_lea.vmem %s3, 16
      %v2134 = vld [vmem:[%s2133] sm:$0xf]
      %v2136 = vsel %vm1770, %v2129, 0
      %v2139 = vsel %vm1770, %v2130, 0
      %v2142 = vsel %vm1770, %v2131, 0
      %v2145 = vsel %vm1770, %v2132, 0
      %v2148 = vsel %vm1898, %v2134, 0
      %2150 = vmatpush.bf16.msra.mxu0 0
      %2151 = vmatpush.bf16.msra.mxu0 0
      %2152 = vmatpush.bf16.msra.mxu0 0
      %2153 = vmatpush.bf16.msra.mxu0 0
      %2154 = vmatpush.bf16.msra.mxu0 0
      %2155 = vmatpush.bf16.msra.mxu0 0
      %2156 = vmatpush.bf16.msra.mxu0 0
      %2157 = vmatpush.bf16.msra.mxu0 %v2148
      %2158 = vmatmul.bf16.gmra.mxu0 %v2136
      %v2159 = vpop.f32.mrf.mxu0
      %v2160 = vadd.f32 0.0, %v2159
      %v2161 = vpop.f32.mrf.mxu0
      %v2162 = vadd.f32 0.0, %v2161
      %2163 = vmatmul.bf16.gmra.mxu0 %v2139
      %v2164 = vpop.f32.mrf.mxu0
      %v2165 = vadd.f32 0.0, %v2164
      %v2166 = vpop.f32.mrf.mxu0
      %v2167 = vadd.f32 0.0, %v2166
      %2168 = vmatmul.bf16.gmra.mxu0 %v2142
      %v2169 = vpop.f32.mrf.mxu0
      %v2170 = vadd.f32 0.0, %v2169
      %v2171 = vpop.f32.mrf.mxu0
      %v2172 = vadd.f32 0.0, %v2171
      %2173 = vmatmul.bf16.gmra.mxu0 %v2145
      %v2174 = vpop.f32.mrf.mxu0
      %v2175 = vadd.f32 0.0, %v2174
      %v2176 = vpop.f32.mrf.mxu0
      %v2177 = vadd.f32 0.0, %v2176
      %2178 = vdwg.mxu0
      %v2179 = vadd.f32 %v2115, %v2160
      %v2180 = vadd.f32 %v2116, %v2162
      %v2181 = vadd.f32 %v2117, %v2165
      %v2182 = vadd.f32 %v2118, %v2167
      %v2183 = vadd.f32 %v2119, %v2170
      %v2184 = vadd.f32 %v2120, %v2172
      %v2185 = vadd.f32 %v2121, %v2175
      %v2186 = vadd.f32 %v2122, %v2177
      %v2187 = vrot.slane %v1823, 2
      %v2188 = vrot.slane %v1824, 2
      %v2189 = vsel %vm1327, %v2187, %v2188
      %v2191 = vpack.c.bf16 %v1983, %v1980
      %v2192 = vpack.c.bf16 %v1989, %v1986
      %v2193 = vpack.c.bf16 %v1995, %v1992
      %v2194 = vpack.c.bf16 %v2189, %v1998
      %s2195 = scalar_lea.vmem %s3, 20
      %v2196 = vld [vmem:[%s2195] sm:$0xf]
      %v2198 = vsel %vm1770, %v2191, 0
      %v2201 = vsel %vm1770, %v2192, 0
      %v2204 = vsel %vm1770, %v2193, 0
      %v2207 = vsel %vm1770, %v2194, 0
      %v2210 = vsel %vm1898, %v2196, 0
      %2212 = vmatpush.bf16.msra.mxu0 0
      %2213 = vmatpush.bf16.msra.mxu0 0
      %2214 = vmatpush.bf16.msra.mxu0 0
      %2215 = vmatpush.bf16.msra.mxu0 0
      %2216 = vmatpush.bf16.msra.mxu0 0
      %2217 = vmatpush.bf16.msra.mxu0 0
      %2218 = vmatpush.bf16.msra.mxu0 0
      %2219 = vmatpush.bf16.msra.mxu0 %v2210
      %2220 = vmatmul.bf16.gmra.mxu0 %v2198
      %v2221 = vpop.f32.mrf.mxu0
      %v2222 = vadd.f32 0.0, %v2221
      %v2223 = vpop.f32.mrf.mxu0
      %v2224 = vadd.f32 0.0, %v2223
      %2225 = vmatmul.bf16.gmra.mxu0 %v2201
      %v2226 = vpop.f32.mrf.mxu0
      %v2227 = vadd.f32 0.0, %v2226
      %v2228 = vpop.f32.mrf.mxu0
      %v2229 = vadd.f32 0.0, %v2228
      %2230 = vmatmul.bf16.gmra.mxu0 %v2204
      %v2231 = vpop.f32.mrf.mxu0
      %v2232 = vadd.f32 0.0, %v2231
      %v2233 = vpop.f32.mrf.mxu0
      %v2234 = vadd.f32 0.0, %v2233
      %2235 = vmatmul.bf16.gmra.mxu0 %v2207
      %v2236 = vpop.f32.mrf.mxu0
      %v2237 = vadd.f32 0.0, %v2236
      %v2238 = vpop.f32.mrf.mxu0
      %v2239 = vadd.f32 0.0, %v2238
      %2240 = vdwg.mxu0
      %v2241 = vadd.f32 %v2179, %v2222
      %v2242 = vadd.f32 %v2180, %v2224
      %v2243 = vadd.f32 %v2181, %v2227
      %v2244 = vadd.f32 %v2182, %v2229
      %v2245 = vadd.f32 %v2183, %v2232
      %v2246 = vadd.f32 %v2184, %v2234
      %v2247 = vadd.f32 %v2185, %v2237
      %v2248 = vadd.f32 %v2186, %v2239
      %v2249 = vpack.c.bf16 %v1825, %v1823
      %s2250 = scalar_lea.vmem %s3, 24
      %v2251 = vld [vmem:[%s2250] sm:$0xf]
      %v2253 = vsel %vm1770, %v2249, 0
      %v2256 = vsel %vm1898, %v2251, 0
      %2258 = vmatpush.bf16.msra.mxu0 0
      %2259 = vmatpush.bf16.msra.mxu0 0
      %2260 = vmatpush.bf16.msra.mxu0 0
      %2261 = vmatpush.bf16.msra.mxu0 0
      %2262 = vmatpush.bf16.msra.mxu0 0
      %2263 = vmatpush.bf16.msra.mxu0 0
      %2264 = vmatpush.bf16.msra.mxu0 0
      %2265 = vmatpush.bf16.msra.mxu0 %v2256
      %2266 = vmatmul.bf16.gmra.mxu0 %v1935
      %v2267 = vpop.f32.mrf.mxu0
      %v2268 = vadd.f32 0.0, %v2267
      %v2269 = vpop.f32.mrf.mxu0
      %v2270 = vadd.f32 0.0, %v2269
      %2271 = vmatmul.bf16.gmra.mxu0 %v1938
      %v2272 = vpop.f32.mrf.mxu0
      %v2273 = vadd.f32 0.0, %v2272
      %v2274 = vpop.f32.mrf.mxu0
      %v2275 = vadd.f32 0.0, %v2274
      %2276 = vmatmul.bf16.gmra.mxu0 %v1941
      %v2277 = vpop.f32.mrf.mxu0
      %v2278 = vadd.f32 0.0, %v2277
      %v2279 = vpop.f32.mrf.mxu0
      %v2280 = vadd.f32 0.0, %v2279
      %2281 = vmatmul.bf16.gmra.mxu0 %v2253
      %v2282 = vpop.f32.mrf.mxu0
      %v2283 = vadd.f32 0.0, %v2282
      %v2284 = vpop.f32.mrf.mxu0
      %v2285 = vadd.f32 0.0, %v2284
      %2286 = vdwg.mxu0
      %v2287 = vadd.f32 %v2241, %v2268
      %v2288 = vadd.f32 %v2242, %v2270
      %v2289 = vadd.f32 %v2243, %v2273
      %v2290 = vadd.f32 %v2244, %v2275
      %v2291 = vadd.f32 %v2245, %v2278
      %v2292 = vadd.f32 %v2246, %v2280
      %v2293 = vadd.f32 %v2247, %v2283
      %v2294 = vadd.f32 %v2248, %v2285
      %v2297 = vrot.slane %v1825, 1
      %v2298 = vrot.slane %v1826, 1
      %v2299 = vsel %vm1199, %v2297, %v2298
      %v2301 = vpack.c.bf16 %v2299, %v2127
      %s2302 = scalar_lea.vmem %s3, 28
      %v2303 = vld [vmem:[%s2302] sm:$0xf]
      %v2305 = vsel %vm1770, %v2301, 0
      %v2308 = vsel %vm1898, %v2303, 0
      %2310 = vmatpush.bf16.msra.mxu0 0
      %2311 = vmatpush.bf16.msra.mxu0 0
      %2312 = vmatpush.bf16.msra.mxu0 0
      %2313 = vmatpush.bf16.msra.mxu0 0
      %2314 = vmatpush.bf16.msra.mxu0 0
      %2315 = vmatpush.bf16.msra.mxu0 0
      %2316 = vmatpush.bf16.msra.mxu0 0
      %2317 = vmatpush.bf16.msra.mxu0 %v2308
      %2318 = vmatmul.bf16.gmra.mxu0 %v1890
      %v2319 = vpop.f32.mrf.mxu0
      %v2320 = vadd.f32 0.0, %v2319
      %v2321 = vpop.f32.mrf.mxu0
      %v2322 = vadd.f32 0.0, %v2321
      %2323 = vmatmul.bf16.gmra.mxu0 %v1893
      %v2324 = vpop.f32.mrf.mxu0
      %v2325 = vadd.f32 0.0, %v2324
      %v2326 = vpop.f32.mrf.mxu0
      %v2327 = vadd.f32 0.0, %v2326
      %2328 = vmatmul.bf16.gmra.mxu0 %v1896
      %v2329 = vpop.f32.mrf.mxu0
      %v2330 = vadd.f32 0.0, %v2329
      %v2331 = vpop.f32.mrf.mxu0
      %v2332 = vadd.f32 0.0, %v2331
      %2333 = vmatmul.bf16.gmra.mxu0 %v2305
      %v2334 = vpop.f32.mrf.mxu0
      %v2335 = vadd.f32 0.0, %v2334
      %v2336 = vpop.f32.mrf.mxu0
      %v2337 = vadd.f32 0.0, %v2336
      %2338 = vdwg.mxu0
      %v2339 = vadd.f32 %v2287, %v2320
      %v2340 = vadd.f32 %v2288, %v2322
      %v2341 = vadd.f32 %v2289, %v2325
      %v2342 = vadd.f32 %v2290, %v2327
      %v2343 = vadd.f32 %v2291, %v2330
      %v2344 = vadd.f32 %v2292, %v2332
      %v2345 = vadd.f32 %v2293, %v2335
      %v2346 = vadd.f32 %v2294, %v2337
      %v2347 = vrot.slane %v1825, 2
      %v2348 = vrot.slane %v1826, 2
      %v2349 = vsel %vm1327, %v2347, %v2348
      %v2351 = vpack.c.bf16 %v2349, %v2189
      %s2352 = scalar_lea.vmem %s3, 32
      %v2353 = vld [vmem:[%s2352] sm:$0xf]
      %v2355 = vsel %vm1770, %v2351, 0
      %v2358 = vsel %vm1898, %v2353, 0
      %2360 = vmatpush.bf16.msra.mxu0 0
      %2361 = vmatpush.bf16.msra.mxu0 0
      %2362 = vmatpush.bf16.msra.mxu0 0
      %2363 = vmatpush.bf16.msra.mxu0 0
      %2364 = vmatpush.bf16.msra.mxu0 0
      %2365 = vmatpush.bf16.msra.mxu0 0
      %2366 = vmatpush.bf16.msra.mxu0 0
      %2367 = vmatpush.bf16.msra.mxu0 %v2358
      %2368 = vmatmul.bf16.gmra.mxu0 %v2017
      %v2369 = vpop.f32.mrf.mxu0
      %v2370 = vadd.f32 0.0, %v2369
      %v2371 = vpop.f32.mrf.mxu0
      %v2372 = vadd.f32 0.0, %v2371
      %2373 = vmatmul.bf16.gmra.mxu0 %v2020
      %v2374 = vpop.f32.mrf.mxu0
      %v2375 = vadd.f32 0.0, %v2374
      %v2376 = vpop.f32.mrf.mxu0
      %v2377 = vadd.f32 0.0, %v2376
      %2378 = vmatmul.bf16.gmra.mxu0 %v2023
      %v2379 = vpop.f32.mrf.mxu0
      %v2380 = vadd.f32 0.0, %v2379
      %v2381 = vpop.f32.mrf.mxu0
      %v2382 = vadd.f32 0.0, %v2381
      %2383 = vmatmul.bf16.gmra.mxu0 %v2355
      %v2384 = vpop.f32.mrf.mxu0
      %v2385 = vadd.f32 0.0, %v2384
      %v2386 = vpop.f32.mrf.mxu0
      %v2387 = vadd.f32 0.0, %v2386
      %2388 = vdwg.mxu0
      %v2389 = vadd.f32 %v2339, %v2370
      %v2390 = vadd.f32 %v2340, %v2372
      %v2391 = vadd.f32 %v2341, %v2375
      %v2392 = vadd.f32 %v2342, %v2377
      %v2393 = vadd.f32 %v2343, %v2380
      %v2394 = vadd.f32 %v2344, %v2382
      %v2395 = vadd.f32 %v2345, %v2385
      %v2396 = vadd.f32 %v2346, %v2387
      %v2397 = vld [vmem:[%s4] sm:$0x1]
      %v2399 = vperm.slane %v2397, 0
      %v2401 = vadd.f32 %v2389, %v2399
      %v2402 = vadd.f32 %v2390, %v2399
      %v2403 = vadd.f32 %v2391, %v2399
      %v2404 = vadd.f32 %v2392, %v2399
      %v2405 = vadd.f32 %v2393, %v2399
      %v2406 = vadd.f32 %v2394, %v2399
      %v2407 = vadd.f32 %v2395, %v2399
      %v2408 = vadd.f32 %v2396, %v2399
      %v2409 = vmax.f32 %v2401, 0.0
      %v2410 = vmax.f32 %v2402, 0.0
      %v2411 = vmax.f32 %v2403, 0.0
      %v2412 = vmax.f32 %v2404, 0.0
      %v2413 = vmax.f32 %v2405, 0.0
      %v2414 = vmax.f32 %v2406, 0.0
      %v2415 = vmax.f32 %v2407, 0.0
      %v2416 = vmax.f32 %v2408, 0.0
      %2417 = vst.msk [vmem:[%s224] sm:$0xff] %vm1770, %v2409
      %2418 = vst.msk [vmem:[%s224 + $0x8] sm:$0xff] %vm1770, %v2410
      %2419 = vst.msk [vmem:[%s224 + $0x10] sm:$0xff] %vm1770, %v2411
      %2420 = vst.msk [vmem:[%s224 + $0x18] sm:$0xff] %vm1770, %v2412
      %2421 = vst.msk [vmem:[%s224 + $0x20] sm:$0xff] %vm1770, %v2413
      %2422 = vst.msk [vmem:[%s224 + $0x28] sm:$0xff] %vm1770, %v2414
      %2423 = vst.msk [vmem:[%s224 + $0x30] sm:$0xff] %vm1770, %v2415
      %2424 = vst.msk [vmem:[%s224 + $0x38] sm:$0xff] %vm1770, %v2416
      %p2425 = scmp.lt.s32.totalorder %s16, 1
      %s2426 = scalar_select %p2425, %s16, 1
      %s2427 = smul.addr %s2426, 8
      %s2428 = smul.addr %s2427, 8
      %s2429 = scalar_lea.vmem %s5, %s2428
      // Predicated region
      $region41: #{down_sample_forward.1} parent=39 // pred_check
        %p2430 = pneg %p144
      $region42: #{down_sample_forward.1} parent=39 // pred_check_branch
        %2432 = sbr.rel (%p2430) target = $region44
      $region43: #{down_sample_forward.1} parent=39 // pred_region
        _
      $region44: #{down_sample_forward.1} parent=39 // pred_fallthru
        _
    $region40: #{down_sample_forward.1} parent=5 // pred_fallthru
      _
    %p2433 = scmp.le.s32.totalorder 2, %s11
    // Predicated region
    $region45: #{down_sample_forward.1} parent=5 // pred_check
      %p2434 = pneg %p2433
    $region46: #{down_sample_forward.1} parent=5 // pred_check_branch
      %2436 = sbr.rel (%p2434) target = $region48
    $region47: #{down_sample_forward.1} parent=5 // pred_region
      %s2437 = ssub.s32 %s11, 2
      // Predicated region
      $region49: #{down_sample_forward.1} parent=47 // pred_check
        %p2438 = pneg %p150
      $region50: #{down_sample_forward.1} parent=47 // pred_check_branch
        %2440 = sbr.rel (%p2438) target = $region52
      $region51: #{down_sample_forward.1} parent=47 // pred_region
        %p2441 = scmp.lt.s32.totalorder %s17, 1
        %s2442 = scalar_select %p2441, %s17, 1
        %s2443 = smul.addr %s2442, 8
        %s2444 = smul.addr %s2443, 8
        %s2445 = scalar_lea.vmem %s5, %s2444
      $region52: #{down_sample_forward.1} parent=47 // pred_fallthru
        _
    $region48: #{down_sample_forward.1} parent=5 // pred_fallthru
      _
  $region6: #{down_sample_forward.1} parent=0 // loop_footer
    %s15 = sadd.s32 1, %s11
  $region7: #{down_sample_forward.1} parent=0 // loop_footer_branch
    %10 = sbr.rel target = $region3
  $region8: #{down_sample_forward.1} parent=0 // loop_exit
    _

</llo_original>
